<compile_context>
chip_gen: v7x
topology: tpu7x:2x2x1
jax: 0.10.0
libtpu: 0.0.40
codegen_flags: <defaults>
</compile_context>

<pallas_src>
import jax
import jax.numpy as jnp
from jax import lax
from jax.experimental import pallas as pl
from jax.experimental.pallas import tpu as pltpu

MAX_LENGTH = 64      # max_length + 64 must equal 128 (decoder_fc1 in_features)
VOCAB_SIZE = 512
EMBED_SIZE = 100
HIDDEN = 64
BN_EPS = 1e-5


# ----------------------------------------------------------------------------- kernel
def custom_model_kernel(img_ref, text_ref,
                        w1_ref, b1_ref,           # img_fc1 with BN folded in
                        wr_ref, br_ref,           # img_rep
                        wih_ref, whh_ref, blstm_ref,
                        wfc1a_ref, wfc1b_ref, bfc1_ref,
                        wfc2_ref, bfc2_ref,
                        out_ref,
                        xp_ref):                  # VMEM scratch (T*TB, 4H) f32
    TB = img_ref.shape[0]
    T = text_ref.shape[0] // TB

    # ---------------- image branch (BatchNorm already folded into w1/b1) ----------------
    x = img_ref[...]                                                            # (TB,512) bf16
    h_img = jnp.dot(x, w1_ref[...], preferred_element_type=jnp.float32) + b1_ref[...]
    h_img = jnp.maximum(h_img, 0.0)                                             # ReLU
    img_rep = jnp.dot(h_img.astype(jnp.bfloat16), wr_ref[...],
                      preferred_element_type=jnp.float32) + br_ref[...]         # (TB,64) f32

    # ---------------- text branch (LSTM) ----------------
    # Hoisted input projection for all T timesteps: one large MXU matmul, bias added once
    # (blstm = b_ih + b_hh).  Rows of text_ref / xp_ref are time-major: row t*TB + b.
    xp_ref[...] = (jnp.dot(text_ref[...], wih_ref[...],
                           preferred_element_type=jnp.float32)
                   + blstm_ref[...])                                            # (T*TB, 4H)

    whh = whh_ref[...]                                                          # (64, 256) bf16
    h_t = jnp.zeros((TB, HIDDEN), jnp.float32)
    c_t = jnp.zeros((TB, HIDDEN), jnp.float32)

    # Static full unroll (T is a trace-time constant): only the small recurrent matmul
    # plus VPU/EUP gate math remain on the serial dependency chain.
    for t in range(T):
        gates = xp_ref[t * TB:(t + 1) * TB, :] + jnp.dot(
            h_t.astype(jnp.bfloat16), whh, preferred_element_type=jnp.float32)  # (TB, 256)
        # PyTorch gate order i,f,g,o (64 lanes each). Sigmoid on the [i|f] pair covers a
        # full 128-lane vreg in one op; tanh on g, sigmoid on o.
        s_if = jax.nn.sigmoid(gates[:, :2 * HIDDEN])
        g_g = jnp.tanh(gates[:, 2 * HIDDEN:3 * HIDDEN])
        o_g = jax.nn.sigmoid(gates[:, 3 * HIDDEN:])
        c_t = s_if[:, HIDDEN:] * c_t + s_if[:, :HIDDEN] * g_g
        h_t = o_g * jnp.tanh(c_t)

    # ---------------- decoder ----------------
    # Split matmul instead of a lane-dim concat of two 64-wide tiles.
    f1 = (jnp.dot(img_rep.astype(jnp.bfloat16), wfc1a_ref[...],
                  preferred_element_type=jnp.float32)
          + jnp.dot(h_t.astype(jnp.bfloat16), wfc1b_ref[...],
                    preferred_element_type=jnp.float32)
          + bfc1_ref[...])
    f1 = jnp.maximum(f1, 0.0)                                                   # (TB, 256)
    logits = jnp.dot(f1.astype(jnp.bfloat16), wfc2_ref[...],
                     preferred_element_type=jnp.float32) + bfc2_ref[...]        # (TB, V)
    m = jnp.max(logits, axis=-1, keepdims=True)
    e = jnp.exp(logits - m)
    out_ref[...] = e / jnp.sum(e, axis=-1, keepdims=True)


# ----------------------------------------------------------------------------- params
def init_params(key):
    ks = jax.random.split(key, 16)
    scale = 0.02
    # LSTM weights are stored transposed vs. PyTorch ((in,4H)/(H,4H)); blstm = b_ih + b_hh.
    p = {
        "w1":    scale * jax.random.normal(ks[0], (512, HIDDEN), jnp.float32),
        "b1":    scale * jax.random.normal(ks[1], (1, HIDDEN), jnp.float32),
        "bn_g":  1.0 + scale * jax.random.normal(ks[2], (1, HIDDEN), jnp.float32),
        "bn_b":  scale * jax.random.normal(ks[3], (1, HIDDEN), jnp.float32),
        "bn_m":  scale * jax.random.normal(ks[4], (1, HIDDEN), jnp.float32),
        "bn_v":  jnp.abs(jax.random.normal(ks[5], (1, HIDDEN), jnp.float32)) + 0.5,
        "wr":    scale * jax.random.normal(ks[6], (HIDDEN, MAX_LENGTH), jnp.float32),
        "br":    scale * jax.random.normal(ks[7], (1, MAX_LENGTH), jnp.float32),
        "wih":   scale * jax.random.normal(ks[8], (EMBED_SIZE, 4 * HIDDEN), jnp.float32),
        "whh":   scale * jax.random.normal(ks[9], (HIDDEN, 4 * HIDDEN), jnp.float32),
        "blstm": scale * jax.random.normal(ks[10], (1, 4 * HIDDEN), jnp.float32),
        "wfc1":  scale * jax.random.normal(ks[11], (MAX_LENGTH + HIDDEN, 256), jnp.float32),
        "bfc1":  scale * jax.random.normal(ks[12], (1, 256), jnp.float32),
        "wfc2":  scale * jax.random.normal(ks[13], (256, VOCAB_SIZE), jnp.float32),
        "bfc2":  scale * jax.random.normal(ks[14], (1, VOCAB_SIZE), jnp.float32),
    }
    return p


def _fold_params(params):
    """Host-side folding: eval BN into img_fc1, split decoder_fc1, bf16 weights."""
    scale = params["bn_g"] * lax.rsqrt(params["bn_v"] + BN_EPS)                  # (1,64)
    w1f = (params["w1"] * scale).astype(jnp.bfloat16)
    b1f = (params["b1"] - params["bn_m"]) * scale + params["bn_b"]               # f32
    wfc1a = params["wfc1"][:MAX_LENGTH].astype(jnp.bfloat16)                     # img_rep half
    wfc1b = params["wfc1"][MAX_LENGTH:].astype(jnp.bfloat16)                     # h_T half
    return (
        w1f, b1f,
        params["wr"].astype(jnp.bfloat16), params["br"],
        params["wih"].astype(jnp.bfloat16), params["whh"].astype(jnp.bfloat16),
        params["blstm"],
        wfc1a, wfc1b, params["bfc1"],
        params["wfc2"].astype(jnp.bfloat16), params["bfc2"],
    )


# ----------------------------------------------------------------------------- wrapper
def custom_model_forward(img_inputs, text_embed, params):
    """img_inputs: (B, 512) f32.  text_embed: (B, T, EMBED_SIZE) f32 (output of the
    external CLIP text encoder).  Returns (B, 1, VOCAB_SIZE) softmax probabilities."""
    # TODO(synk): CLIP `encode_text` (self.text_embedding) has no Pallas equivalent here;
    # the text embedding is taken as a kernel input instead.
    B, T, E = text_embed.shape
    assert E == EMBED_SIZE and img_inputs.shape == (B, 512)

    # Batch tile: whole batch if small, otherwise 128-row tiles (multiple of 8, sized for
    # v7x's 64 MiB VMEM with the (T*TB, 256) f32 scratch + bf16 text slab double-buffered).
    TB = B if B <= 128 else 128
    Bp = ((B + TB - 1) // TB) * TB
    nb = Bp // TB

    def pad_batch(x):
        if Bp == B:
            return x
        return jnp.pad(x, [(0, Bp - B)] + [(0, 0)] * (x.ndim - 1))

    img_p = pad_batch(img_inputs.astype(jnp.float32)).astype(jnp.bfloat16)       # (Bp, 512)

    # Per-tile, time-major 2-D text slab: slab[i, t*TB + b, :] = text[i*TB + b, t, :]
    text_p = pad_batch(text_embed.astype(jnp.float32))                           # (Bp, T, E)
    text_slab = (jnp.transpose(text_p, (1, 0, 2))                                # (T, Bp, E)
                 .reshape(T, nb, TB, E)
                 .transpose(1, 0, 2, 3)
                 .reshape(nb, T * TB, E)
                 .astype(jnp.bfloat16))

    folded = _fold_params(params)

    def wspec(shape):
        return pl.BlockSpec(shape, lambda i, _s=shape: (0,) * len(_s))           # resident weights

    grid_spec = pltpu.PrefetchScalarGridSpec(
        num_scalar_prefetch=0,
        grid=(nb,),
        in_specs=[
            pl.BlockSpec((TB, 512), lambda i: (i, 0)),                           # img
            pl.BlockSpec((None, T * TB, EMBED_SIZE), lambda i: (i, 0, 0)),       # text slab
            wspec((512, HIDDEN)), wspec((1, HIDDEN)),                            # w1, b1 (BN folded)
            wspec((HIDDEN, MAX_LENGTH)), wspec((1, MAX_LENGTH)),                 # wr, br
            wspec((EMBED_SIZE, 4 * HIDDEN)), wspec((HIDDEN, 4 * HIDDEN)),        # wih, whh
            wspec((1, 4 * HIDDEN)),                                              # blstm
            wspec((MAX_LENGTH, 256)), wspec((HIDDEN, 256)), wspec((1, 256)),     # wfc1a/b, bfc1
            wspec((256, VOCAB_SIZE)), wspec((1, VOCAB_SIZE)),                    # wfc2, bfc2
        ],
        out_specs=pl.BlockSpec((TB, VOCAB_SIZE), lambda i: (i, 0)),
        scratch_shapes=[pltpu.VMEM((T * TB, 4 * HIDDEN), jnp.float32)],
    )

    out = pl.pallas_call(
        custom_model_kernel,
        out_shape=jax.ShapeDtypeStruct((Bp, VOCAB_SIZE), jnp.float32),
        grid_spec=grid_spec,
        compiler_params=pltpu.CompilerParams(
            dimension_semantics=("parallel",),
            vmem_limit_bytes=32 * 1024 * 1024,
        ),
    )(img_p, text_slab, *folded)

    return out[:B, None, :]                                                      # (B, 1, VOCAB)


# ----------------------------------------------------------------------------- reference
def reference_forward(img_inputs, text_embed, params):
    """Pure-JAX f32 reference matching the PyTorch module (eval mode)."""
    h = img_inputs @ params["w1"] + params["b1"]
    h = (h - params["bn_m"]) / jnp.sqrt(params["bn_v"] + BN_EPS) * params["bn_g"] + params["bn_b"]
    h = jnp.maximum(h, 0.0)
    img_rep = h @ params["wr"] + params["br"]

    B, T, _ = text_embed.shape
    h_t = jnp.zeros((B, HIDDEN), jnp.float32)
    c_t = jnp.zeros((B, HIDDEN), jnp.float32)
    for t in range(T):
        gates = text_embed[:, t, :] @ params["wih"] + h_t @ params["whh"] + params["blstm"]
        i_g = jax.nn.sigmoid(gates[:, 0 * HIDDEN:1 * HIDDEN])
        f_g = jax.nn.sigmoid(gates[:, 1 * HIDDEN:2 * HIDDEN])
        g_g = jnp.tanh(gates[:, 2 * HIDDEN:3 * HIDDEN])
        o_g = jax.nn.sigmoid(gates[:, 3 * HIDDEN:4 * HIDDEN])
        c_t = f_g * c_t + i_g * g_g
        h_t = o_g * jnp.tanh(c_t)

    dec_in = jnp.concatenate([img_rep, h_t], axis=-1)
    f1 = jnp.maximum(dec_in @ params["wfc1"] + params["bfc1"], 0.0)
    logits = f1 @ params["wfc2"] + params["bfc2"]
    return jax.nn.softmax(logits, axis=-1)[:, None, :]


if __name__ == "__main__":
    key = jax.random.PRNGKey(0)
    k_param, k_img, k_txt = jax.random.split(key, 3)

    params = init_params(k_param)

    B, T = 2, 8
    img_inputs = jax.random.normal(k_img, (B, 512), jnp.float32)
    text_embed = jax.random.normal(k_txt, (B, T, EMBED_SIZE), jnp.float32)

    out = custom_model_forward(img_inputs, text_embed, params)
    out = jax.block_until_ready(out)

    assert out.shape == (B, 1, VOCAB_SIZE)
    # softmax rows sum to 1
    assert bool(jnp.all(jnp.abs(jnp.sum(out, axis=-1) - 1.0) < 1e-4))
    # matches the f32 reference (bf16 matmul operands, f32 accumulation)
    ref = reference_forward(img_inputs, text_embed, params)
    err = float(jnp.max(jnp.abs(out - ref)))
    assert err < 1e-3, f"max abs diff vs reference: {err}"
    print("KERNEL_OK")
</pallas_src>

<mosaic_0001>
module attributes {stable_mosaic.version = 11 : i64} {
  func.func @custom_model_kernel(%arg0: i32, %arg1: memref<2x512xbf16, #tpu.memory_space<vmem>>, %arg2: memref<1x16x100xbf16, #tpu.memory_space<vmem>>, %arg3: memref<512x64xbf16, #tpu.memory_space<vmem>>, %arg4: memref<1x64xf32, #tpu.memory_space<vmem>>, %arg5: memref<64x64xbf16, #tpu.memory_space<vmem>>, %arg6: memref<1x64xf32, #tpu.memory_space<vmem>>, %arg7: memref<100x256xbf16, #tpu.memory_space<vmem>>, %arg8: memref<64x256xbf16, #tpu.memory_space<vmem>>, %arg9: memref<1x256xf32, #tpu.memory_space<vmem>>, %arg10: memref<64x256xbf16, #tpu.memory_space<vmem>>, %arg11: memref<64x256xbf16, #tpu.memory_space<vmem>>, %arg12: memref<1x256xf32, #tpu.memory_space<vmem>>, %arg13: memref<256x512xbf16, #tpu.memory_space<vmem>>, %arg14: memref<1x512xf32, #tpu.memory_space<vmem>>, %arg15: memref<2x512xf32, #tpu.memory_space<vmem>>, %arg16: memref<16x256xf32, #tpu.memory_space<vmem>>) attributes {dimension_semantics = [#tpu.dimension_semantics<parallel>], iteration_bounds = array<i64: 1>, scalar_prefetch = 0 : i64, scratch_operands = 1 : i64, tpu.core_type = #tpu.core_type<tc>, window_params = [{transform_indices = @transform_0, window_bounds = array<i64: 2, 512>}, {transform_indices = @transform_1, window_bounds = array<i64: 1, 16, 100>}, {pipeline_mode = #tpu.pipeline_mode<synchronous>, transform_indices = @transform_2, window_bounds = array<i64: 512, 64>}, {pipeline_mode = #tpu.pipeline_mode<synchronous>, transform_indices = @transform_3, window_bounds = array<i64: 1, 64>}, {pipeline_mode = #tpu.pipeline_mode<synchronous>, transform_indices = @transform_4, window_bounds = array<i64: 64, 64>}, {pipeline_mode = #tpu.pipeline_mode<synchronous>, transform_indices = @transform_5, window_bounds = array<i64: 1, 64>}, {pipeline_mode = #tpu.pipeline_mode<synchronous>, transform_indices = @transform_6, window_bounds = array<i64: 100, 256>}, {pipeline_mode = #tpu.pipeline_mode<synchronous>, transform_indices = @transform_7, window_bounds = array<i64: 64, 256>}, {pipeline_mode = #tpu.pipeline_mode<synchronous>, transform_indices = @transform_8, window_bounds = array<i64: 1, 256>}, {pipeline_mode = #tpu.pipeline_mode<synchronous>, transform_indices = @transform_9, window_bounds = array<i64: 64, 256>}, {pipeline_mode = #tpu.pipeline_mode<synchronous>, transform_indices = @transform_10, window_bounds = array<i64: 64, 256>}, {pipeline_mode = #tpu.pipeline_mode<synchronous>, transform_indices = @transform_11, window_bounds = array<i64: 1, 256>}, {pipeline_mode = #tpu.pipeline_mode<synchronous>, transform_indices = @transform_12, window_bounds = array<i64: 256, 512>}, {pipeline_mode = #tpu.pipeline_mode<synchronous>, transform_indices = @transform_13, window_bounds = array<i64: 1, 512>}, {transform_indices = @transform_14, window_bounds = array<i64: 2, 512>}]} {
    %c0 = arith.constant 0 : index
    %c0_0 = arith.constant 0 : index
    %0 = vector.load %arg1[%c0, %c0_0] : memref<2x512xbf16, #tpu.memory_space<vmem>>, vector<2x512xbf16>
    %c0_1 = arith.constant 0 : index
    %c0_2 = arith.constant 0 : index
    %1 = vector.load %arg3[%c0_1, %c0_2] : memref<512x64xbf16, #tpu.memory_space<vmem>>, vector<512x64xbf16>
    %cst = arith.constant dense<0.000000e+00> : vector<2x64xf32>
    %2 = tpu.matmul %0, %1, %cst {dimension_numbers = #tpu.dot_dimension_numbers<[1], [0], [0], [1], [0, 0, 1, 1], [], []>} : vector<2x512xbf16>, vector<512x64xbf16>, vector<2x64xf32> -> vector<2x64xf32>
    %c0_3 = arith.constant 0 : index
    %c0_4 = arith.constant 0 : index
    %3 = vector.load %arg4[%c0_3, %c0_4] : memref<1x64xf32, #tpu.memory_space<vmem>>, vector<1x64xf32>
    %4 = vector.broadcast %3 : vector<1x64xf32> to vector<2x64xf32>
    %5 = arith.addf %2, %4 : vector<2x64xf32>
    %cst_5 = arith.constant 0.000000e+00 : f32
    %6 = vector.broadcast %cst_5 : f32 to vector<2x64xf32>
    %7 = arith.maximumf %5, %6 : vector<2x64xf32>
    %8 = arith.truncf %7 : vector<2x64xf32> to vector<2x64xbf16>
    %c0_6 = arith.constant 0 : index
    %c0_7 = arith.constant 0 : index
    %9 = vector.load %arg5[%c0_6, %c0_7] : memref<64x64xbf16, #tpu.memory_space<vmem>>, vector<64x64xbf16>
    %cst_8 = arith.constant dense<0.000000e+00> : vector<2x64xf32>
    %10 = tpu.matmul %8, %9, %cst_8 {dimension_numbers = #tpu.dot_dimension_numbers<[1], [0], [0], [1], [0, 0, 1, 1], [], []>} : vector<2x64xbf16>, vector<64x64xbf16>, vector<2x64xf32> -> vector<2x64xf32>
    %c0_9 = arith.constant 0 : index
    %c0_10 = arith.constant 0 : index
    %11 = vector.load %arg6[%c0_9, %c0_10] : memref<1x64xf32, #tpu.memory_space<vmem>>, vector<1x64xf32>
    %12 = vector.broadcast %11 : vector<1x64xf32> to vector<2x64xf32>
    %13 = arith.addf %10, %12 : vector<2x64xf32>
    %c0_11 = arith.constant 0 : index
    %c0_12 = arith.constant 0 : index
    %c0_13 = arith.constant 0 : index
    %14 = vector.load %arg2[%c0_11, %c0_12, %c0_13] : memref<1x16x100xbf16, #tpu.memory_space<vmem>>, vector<1x16x100xbf16>
    %15 = vector.shape_cast %14 : vector<1x16x100xbf16> to vector<16x100xbf16>
    %c0_14 = arith.constant 0 : index
    %c0_15 = arith.constant 0 : index
    %16 = vector.load %arg7[%c0_14, %c0_15] : memref<100x256xbf16, #tpu.memory_space<vmem>>, vector<100x256xbf16>
    %cst_16 = arith.constant dense<0.000000e+00> : vector<16x256xf32>
    %17 = tpu.matmul %15, %16, %cst_16 {dimension_numbers = #tpu.dot_dimension_numbers<[1], [0], [0], [1], [0, 0, 1, 1], [], []>} : vector<16x100xbf16>, vector<100x256xbf16>, vector<16x256xf32> -> vector<16x256xf32>
    %c0_17 = arith.constant 0 : index
    %c0_18 = arith.constant 0 : index
    %18 = vector.load %arg9[%c0_17, %c0_18] : memref<1x256xf32, #tpu.memory_space<vmem>>, vector<1x256xf32>
    %19 = vector.broadcast %18 : vector<1x256xf32> to vector<16x256xf32>
    %20 = arith.addf %17, %19 : vector<16x256xf32>
    %c0_19 = arith.constant 0 : index
    %c0_20 = arith.constant 0 : index
    %21 = vector.load %arg16[%c0_19, %c0_20] : memref<16x256xf32, #tpu.memory_space<vmem>>, vector<16x256xf32>
    tpu.vector_store %arg16[%c0_19, %c0_20], %20 {strides = array<i32>} : memref<16x256xf32, #tpu.memory_space<vmem>>, vector<16x256xf32>,
    %c0_21 = arith.constant 0 : index
    %c0_22 = arith.constant 0 : index
    %22 = vector.load %arg8[%c0_21, %c0_22] : memref<64x256xbf16, #tpu.memory_space<vmem>>, vector<64x256xbf16>
    %cst_23 = arith.constant 0.000000e+00 : f32
    %23 = vector.broadcast %cst_23 : f32 to vector<2x64xf32>
    %cst_24 = arith.constant 0.000000e+00 : f32
    %24 = vector.broadcast %cst_24 : f32 to vector<2x64xf32>
    %c0_25 = arith.constant 0 : index
    %c0_26 = arith.constant 0 : index
    %25 = vector.load %arg16[%c0_25, %c0_26] : memref<16x256xf32, #tpu.memory_space<vmem>>, vector<2x256xf32>
    %26 = arith.truncf %23 : vector<2x64xf32> to vector<2x64xbf16>
    %cst_27 = arith.constant dense<0.000000e+00> : vector<2x256xf32>
    %27 = tpu.matmul %26, %22, %cst_27 {dimension_numbers = #tpu.dot_dimension_numbers<[1], [0], [0], [1], [0, 0, 1, 1], [], []>} : vector<2x64xbf16>, vector<64x256xbf16>, vector<2x256xf32> -> vector<2x256xf32>
    %28 = arith.addf %25, %27 : vector<2x256xf32>
    %29 = vector.extract_strided_slice %28 {offsets = [0, 0], sizes = [2, 128], strides = [1, 1]} : vector<2x256xf32> to vector<2x128xf32>
    %30 = arith.negf %29 : vector<2x128xf32>
    %31 = math.exp %30 : vector<2x128xf32>
    %cst_28 = arith.constant 1.000000e+00 : f32
    %32 = vector.broadcast %cst_28 : f32 to vector<2x128xf32>
    %33 = arith.addf %32, %31 : vector<2x128xf32>
    %34 = arith.divf %32, %33 : vector<2x128xf32>
    %35 = vector.extract_strided_slice %28 {offsets = [0, 128], sizes = [2, 64], strides = [1, 1]} : vector<2x256xf32> to vector<2x64xf32>
    %36 = math.tanh %35 : vector<2x64xf32>
    %37 = vector.extract_strided_slice %28 {offsets = [0, 192], sizes = [2, 64], strides = [1, 1]} : vector<2x256xf32> to vector<2x64xf32>
    %38 = arith.negf %37 : vector<2x64xf32>
    %39 = math.exp %38 : vector<2x64xf32>
    %cst_29 = arith.constant 1.000000e+00 : f32
    %40 = vector.broadcast %cst_29 : f32 to vector<2x64xf32>
    %41 = arith.addf %40, %39 : vector<2x64xf32>
    %42 = arith.divf %40, %41 : vector<2x64xf32>
    %43 = vector.extract_strided_slice %34 {offsets = [0, 64], sizes = [2, 64], strides = [1, 1]} : vector<2x128xf32> to vector<2x64xf32>
    %44 = arith.mulf %43, %24 : vector<2x64xf32>
    %45 = vector.extract_strided_slice %34 {offsets = [0, 0], sizes = [2, 64], strides = [1, 1]} : vector<2x128xf32> to vector<2x64xf32>
    %46 = arith.mulf %45, %36 : vector<2x64xf32>
    %47 = arith.addf %44, %46 : vector<2x64xf32>
    %48 = math.tanh %47 : vector<2x64xf32>
    %49 = arith.mulf %42, %48 : vector<2x64xf32>
    %c2 = arith.constant 2 : index
    %c0_30 = arith.constant 0 : index
    %50 = vector.load %arg16[%c2, %c0_30] : memref<16x256xf32, #tpu.memory_space<vmem>>, vector<2x256xf32>
    %51 = arith.truncf %49 : vector<2x64xf32> to vector<2x64xbf16>
    %cst_31 = arith.constant dense<0.000000e+00> : vector<2x256xf32>
    %52 = tpu.matmul %51, %22, %cst_31 {dimension_numbers = #tpu.dot_dimension_numbers<[1], [0], [0], [1], [0, 0, 1, 1], [], []>} : vector<2x64xbf16>, vector<64x256xbf16>, vector<2x256xf32> -> vector<2x256xf32>
    %53 = arith.addf %50, %52 : vector<2x256xf32>
    %54 = vector.extract_strided_slice %53 {offsets = [0, 0], sizes = [2, 128], strides = [1, 1]} : vector<2x256xf32> to vector<2x128xf32>
    %55 = arith.negf %54 : vector<2x128xf32>
    %56 = math.exp %55 : vector<2x128xf32>
    %cst_32 = arith.constant 1.000000e+00 : f32
    %57 = vector.broadcast %cst_32 : f32 to vector<2x128xf32>
    %58 = arith.addf %57, %56 : vector<2x128xf32>
    %59 = arith.divf %57, %58 : vector<2x128xf32>
    %60 = vector.extract_strided_slice %53 {offsets = [0, 128], sizes = [2, 64], strides = [1, 1]} : vector<2x256xf32> to vector<2x64xf32>
    %61 = math.tanh %60 : vector<2x64xf32>
    %62 = vector.extract_strided_slice %53 {offsets = [0, 192], sizes = [2, 64], strides = [1, 1]} : vector<2x256xf32> to vector<2x64xf32>
    %63 = arith.negf %62 : vector<2x64xf32>
    %64 = math.exp %63 : vector<2x64xf32>
    %cst_33 = arith.constant 1.000000e+00 : f32
    %65 = vector.broadcast %cst_33 : f32 to vector<2x64xf32>
    %66 = arith.addf %65, %64 : vector<2x64xf32>
    %67 = arith.divf %65, %66 : vector<2x64xf32>
    %68 = vector.extract_strided_slice %59 {offsets = [0, 64], sizes = [2, 64], strides = [1, 1]} : vector<2x128xf32> to vector<2x64xf32>
    %69 = arith.mulf %68, %47 : vector<2x64xf32>
    %70 = vector.extract_strided_slice %59 {offsets = [0, 0], sizes = [2, 64], strides = [1, 1]} : vector<2x128xf32> to vector<2x64xf32>
    %71 = arith.mulf %70, %61 : vector<2x64xf32>
    %72 = arith.addf %69, %71 : vector<2x64xf32>
    %73 = math.tanh %72 : vector<2x64xf32>
    %74 = arith.mulf %67, %73 : vector<2x64xf32>
    %c4 = arith.constant 4 : index
    %c0_34 = arith.constant 0 : index
    %75 = vector.load %arg16[%c4, %c0_34] : memref<16x256xf32, #tpu.memory_space<vmem>>, vector<2x256xf32>
    %76 = arith.truncf %74 : vector<2x64xf32> to vector<2x64xbf16>
    %cst_35 = arith.constant dense<0.000000e+00> : vector<2x256xf32>
    %77 = tpu.matmul %76, %22, %cst_35 {dimension_numbers = #tpu.dot_dimension_numbers<[1], [0], [0], [1], [0, 0, 1, 1], [], []>} : vector<2x64xbf16>, vector<64x256xbf16>, vector<2x256xf32> -> vector<2x256xf32>
    %78 = arith.addf %75, %77 : vector<2x256xf32>
    %79 = vector.extract_strided_slice %78 {offsets = [0, 0], sizes = [2, 128], strides = [1, 1]} : vector<2x256xf32> to vector<2x128xf32>
    %80 = arith.negf %79 : vector<2x128xf32>
    %81 = math.exp %80 : vector<2x128xf32>
    %cst_36 = arith.constant 1.000000e+00 : f32
    %82 = vector.broadcast %cst_36 : f32 to vector<2x128xf32>
    %83 = arith.addf %82, %81 : vector<2x128xf32>
    %84 = arith.divf %82, %83 : vector<2x128xf32>
    %85 = vector.extract_strided_slice %78 {offsets = [0, 128], sizes = [2, 64], strides = [1, 1]} : vector<2x256xf32> to vector<2x64xf32>
    %86 = math.tanh %85 : vector<2x64xf32>
    %87 = vector.extract_strided_slice %78 {offsets = [0, 192], sizes = [2, 64], strides = [1, 1]} : vector<2x256xf32> to vector<2x64xf32>
    %88 = arith.negf %87 : vector<2x64xf32>
    %89 = math.exp %88 : vector<2x64xf32>
    %cst_37 = arith.constant 1.000000e+00 : f32
    %90 = vector.broadcast %cst_37 : f32 to vector<2x64xf32>
    %91 = arith.addf %90, %89 : vector<2x64xf32>
    %92 = arith.divf %90, %91 : vector<2x64xf32>
    %93 = vector.extract_strided_slice %84 {offsets = [0, 64], sizes = [2, 64], strides = [1, 1]} : vector<2x128xf32> to vector<2x64xf32>
    %94 = arith.mulf %93, %72 : vector<2x64xf32>
    %95 = vector.extract_strided_slice %84 {offsets = [0, 0], sizes = [2, 64], strides = [1, 1]} : vector<2x128xf32> to vector<2x64xf32>
    %96 = arith.mulf %95, %86 : vector<2x64xf32>
    %97 = arith.addf %94, %96 : vector<2x64xf32>
    %98 = math.tanh %97 : vector<2x64xf32>
    %99 = arith.mulf %92, %98 : vector<2x64xf32>
    %c6 = arith.constant 6 : index
    %c0_38 = arith.constant 0 : index
    %100 = vector.load %arg16[%c6, %c0_38] : memref<16x256xf32, #tpu.memory_space<vmem>>, vector<2x256xf32>
    %101 = arith.truncf %99 : vector<2x64xf32> to vector<2x64xbf16>
    %cst_39 = arith.constant dense<0.000000e+00> : vector<2x256xf32>
    %102 = tpu.matmul %101, %22, %cst_39 {dimension_numbers = #tpu.dot_dimension_numbers<[1], [0], [0], [1], [0, 0, 1, 1], [], []>} : vector<2x64xbf16>, vector<64x256xbf16>, vector<2x256xf32> -> vector<2x256xf32>
    %103 = arith.addf %100, %102 : vector<2x256xf32>
    %104 = vector.extract_strided_slice %103 {offsets = [0, 0], sizes = [2, 128], strides = [1, 1]} : vector<2x256xf32> to vector<2x128xf32>
    %105 = arith.negf %104 : vector<2x128xf32>
    %106 = math.exp %105 : vector<2x128xf32>
    %cst_40 = arith.constant 1.000000e+00 : f32
    %107 = vector.broadcast %cst_40 : f32 to vector<2x128xf32>
    %108 = arith.addf %107, %106 : vector<2x128xf32>
    %109 = arith.divf %107, %108 : vector<2x128xf32>
    %110 = vector.extract_strided_slice %103 {offsets = [0, 128], sizes = [2, 64], strides = [1, 1]} : vector<2x256xf32> to vector<2x64xf32>
    %111 = math.tanh %110 : vector<2x64xf32>
    %112 = vector.extract_strided_slice %103 {offsets = [0, 192], sizes = [2, 64], strides = [1, 1]} : vector<2x256xf32> to vector<2x64xf32>
    %113 = arith.negf %112 : vector<2x64xf32>
    %114 = math.exp %113 : vector<2x64xf32>
    %cst_41 = arith.constant 1.000000e+00 : f32
    %115 = vector.broadcast %cst_41 : f32 to vector<2x64xf32>
    %116 = arith.addf %115, %114 : vector<2x64xf32>
    %117 = arith.divf %115, %116 : vector<2x64xf32>
    %118 = vector.extract_strided_slice %109 {offsets = [0, 64], sizes = [2, 64], strides = [1, 1]} : vector<2x128xf32> to vector<2x64xf32>
    %119 = arith.mulf %118, %97 : vector<2x64xf32>
    %120 = vector.extract_strided_slice %109 {offsets = [0, 0], sizes = [2, 64], strides = [1, 1]} : vector<2x128xf32> to vector<2x64xf32>
    %121 = arith.mulf %120, %111 : vector<2x64xf32>
    %122 = arith.addf %119, %121 : vector<2x64xf32>
    %123 = math.tanh %122 : vector<2x64xf32>
    %124 = arith.mulf %117, %123 : vector<2x64xf32>
    %c8 = arith.constant 8 : index
    %c0_42 = arith.constant 0 : index
    %125 = vector.load %arg16[%c8, %c0_42] : memref<16x256xf32, #tpu.memory_space<vmem>>, vector<2x256xf32>
    %126 = arith.truncf %124 : vector<2x64xf32> to vector<2x64xbf16>
    %cst_43 = arith.constant dense<0.000000e+00> : vector<2x256xf32>
    %127 = tpu.matmul %126, %22, %cst_43 {dimension_numbers = #tpu.dot_dimension_numbers<[1], [0], [0], [1], [0, 0, 1, 1], [], []>} : vector<2x64xbf16>, vector<64x256xbf16>, vector<2x256xf32> -> vector<2x256xf32>
    %128 = arith.addf %125, %127 : vector<2x256xf32>
    %129 = vector.extract_strided_slice %128 {offsets = [0, 0], sizes = [2, 128], strides = [1, 1]} : vector<2x256xf32> to vector<2x128xf32>
    %130 = arith.negf %129 : vector<2x128xf32>
    %131 = math.exp %130 : vector<2x128xf32>
    %cst_44 = arith.constant 1.000000e+00 : f32
    %132 = vector.broadcast %cst_44 : f32 to vector<2x128xf32>
    %133 = arith.addf %132, %131 : vector<2x128xf32>
    %134 = arith.divf %132, %133 : vector<2x128xf32>
    %135 = vector.extract_strided_slice %128 {offsets = [0, 128], sizes = [2, 64], strides = [1, 1]} : vector<2x256xf32> to vector<2x64xf32>
    %136 = math.tanh %135 : vector<2x64xf32>
    %137 = vector.extract_strided_slice %128 {offsets = [0, 192], sizes = [2, 64], strides = [1, 1]} : vector<2x256xf32> to vector<2x64xf32>
    %138 = arith.negf %137 : vector<2x64xf32>
    %139 = math.exp %138 : vector<2x64xf32>
    %cst_45 = arith.constant 1.000000e+00 : f32
    %140 = vector.broadcast %cst_45 : f32 to vector<2x64xf32>
    %141 = arith.addf %140, %139 : vector<2x64xf32>
    %142 = arith.divf %140, %141 : vector<2x64xf32>
    %143 = vector.extract_strided_slice %134 {offsets = [0, 64], sizes = [2, 64], strides = [1, 1]} : vector<2x128xf32> to vector<2x64xf32>
    %144 = arith.mulf %143, %122 : vector<2x64xf32>
    %145 = vector.extract_strided_slice %134 {offsets = [0, 0], sizes = [2, 64], strides = [1, 1]} : vector<2x128xf32> to vector<2x64xf32>
    %146 = arith.mulf %145, %136 : vector<2x64xf32>
    %147 = arith.addf %144, %146 : vector<2x64xf32>
    %148 = math.tanh %147 : vector<2x64xf32>
    %149 = arith.mulf %142, %148 : vector<2x64xf32>
    %c10 = arith.constant 10 : index
    %c0_46 = arith.constant 0 : index
    %150 = vector.load %arg16[%c10, %c0_46] : memref<16x256xf32, #tpu.memory_space<vmem>>, vector<2x256xf32>
    %151 = arith.truncf %149 : vector<2x64xf32> to vector<2x64xbf16>
    %cst_47 = arith.constant dense<0.000000e+00> : vector<2x256xf32>
    %152 = tpu.matmul %151, %22, %cst_47 {dimension_numbers = #tpu.dot_dimension_numbers<[1], [0], [0], [1], [0, 0, 1, 1], [], []>} : vector<2x64xbf16>, vector<64x256xbf16>, vector<2x256xf32> -> vector<2x256xf32>
    %153 = arith.addf %150, %152 : vector<2x256xf32>
    %154 = vector.extract_strided_slice %153 {offsets = [0, 0], sizes = [2, 128], strides = [1, 1]} : vector<2x256xf32> to vector<2x128xf32>
    %155 = arith.negf %154 : vector<2x128xf32>
    %156 = math.exp %155 : vector<2x128xf32>
    %cst_48 = arith.constant 1.000000e+00 : f32
    %157 = vector.broadcast %cst_48 : f32 to vector<2x128xf32>
    %158 = arith.addf %157, %156 : vector<2x128xf32>
    %159 = arith.divf %157, %158 : vector<2x128xf32>
    %160 = vector.extract_strided_slice %153 {offsets = [0, 128], sizes = [2, 64], strides = [1, 1]} : vector<2x256xf32> to vector<2x64xf32>
    %161 = math.tanh %160 : vector<2x64xf32>
    %162 = vector.extract_strided_slice %153 {offsets = [0, 192], sizes = [2, 64], strides = [1, 1]} : vector<2x256xf32> to vector<2x64xf32>
    %163 = arith.negf %162 : vector<2x64xf32>
    %164 = math.exp %163 : vector<2x64xf32>
    %cst_49 = arith.constant 1.000000e+00 : f32
    %165 = vector.broadcast %cst_49 : f32 to vector<2x64xf32>
    %166 = arith.addf %165, %164 : vector<2x64xf32>
    %167 = arith.divf %165, %166 : vector<2x64xf32>
    %168 = vector.extract_strided_slice %159 {offsets = [0, 64], sizes = [2, 64], strides = [1, 1]} : vector<2x128xf32> to vector<2x64xf32>
    %169 = arith.mulf %168, %147 : vector<2x64xf32>
    %170 = vector.extract_strided_slice %159 {offsets = [0, 0], sizes = [2, 64], strides = [1, 1]} : vector<2x128xf32> to vector<2x64xf32>
    %171 = arith.mulf %170, %161 : vector<2x64xf32>
    %172 = arith.addf %169, %171 : vector<2x64xf32>
    %173 = math.tanh %172 : vector<2x64xf32>
    %174 = arith.mulf %167, %173 : vector<2x64xf32>
    %c12 = arith.constant 12 : index
    %c0_50 = arith.constant 0 : index
    %175 = vector.load %arg16[%c12, %c0_50] : memref<16x256xf32, #tpu.memory_space<vmem>>, vector<2x256xf32>
    %176 = arith.truncf %174 : vector<2x64xf32> to vector<2x64xbf16>
    %cst_51 = arith.constant dense<0.000000e+00> : vector<2x256xf32>
    %177 = tpu.matmul %176, %22, %cst_51 {dimension_numbers = #tpu.dot_dimension_numbers<[1], [0], [0], [1], [0, 0, 1, 1], [], []>} : vector<2x64xbf16>, vector<64x256xbf16>, vector<2x256xf32> -> vector<2x256xf32>
    %178 = arith.addf %175, %177 : vector<2x256xf32>
    %179 = vector.extract_strided_slice %178 {offsets = [0, 0], sizes = [2, 128], strides = [1, 1]} : vector<2x256xf32> to vector<2x128xf32>
    %180 = arith.negf %179 : vector<2x128xf32>
    %181 = math.exp %180 : vector<2x128xf32>
    %cst_52 = arith.constant 1.000000e+00 : f32
    %182 = vector.broadcast %cst_52 : f32 to vector<2x128xf32>
    %183 = arith.addf %182, %181 : vector<2x128xf32>
    %184 = arith.divf %182, %183 : vector<2x128xf32>
    %185 = vector.extract_strided_slice %178 {offsets = [0, 128], sizes = [2, 64], strides = [1, 1]} : vector<2x256xf32> to vector<2x64xf32>
    %186 = math.tanh %185 : vector<2x64xf32>
    %187 = vector.extract_strided_slice %178 {offsets = [0, 192], sizes = [2, 64], strides = [1, 1]} : vector<2x256xf32> to vector<2x64xf32>
    %188 = arith.negf %187 : vector<2x64xf32>
    %189 = math.exp %188 : vector<2x64xf32>
    %cst_53 = arith.constant 1.000000e+00 : f32
    %190 = vector.broadcast %cst_53 : f32 to vector<2x64xf32>
    %191 = arith.addf %190, %189 : vector<2x64xf32>
    %192 = arith.divf %190, %191 : vector<2x64xf32>
    %193 = vector.extract_strided_slice %184 {offsets = [0, 64], sizes = [2, 64], strides = [1, 1]} : vector<2x128xf32> to vector<2x64xf32>
    %194 = arith.mulf %193, %172 : vector<2x64xf32>
    %195 = vector.extract_strided_slice %184 {offsets = [0, 0], sizes = [2, 64], strides = [1, 1]} : vector<2x128xf32> to vector<2x64xf32>
    %196 = arith.mulf %195, %186 : vector<2x64xf32>
    %197 = arith.addf %194, %196 : vector<2x64xf32>
    %198 = math.tanh %197 : vector<2x64xf32>
    %199 = arith.mulf %192, %198 : vector<2x64xf32>
    %c14 = arith.constant 14 : index
    %c0_54 = arith.constant 0 : index
    %200 = vector.load %arg16[%c14, %c0_54] : memref<16x256xf32, #tpu.memory_space<vmem>>, vector<2x256xf32>
    %201 = arith.truncf %199 : vector<2x64xf32> to vector<2x64xbf16>
    %cst_55 = arith.constant dense<0.000000e+00> : vector<2x256xf32>
    %202 = tpu.matmul %201, %22, %cst_55 {dimension_numbers = #tpu.dot_dimension_numbers<[1], [0], [0], [1], [0, 0, 1, 1], [], []>} : vector<2x64xbf16>, vector<64x256xbf16>, vector<2x256xf32> -> vector<2x256xf32>
    %203 = arith.addf %200, %202 : vector<2x256xf32>
    %204 = vector.extract_strided_slice %203 {offsets = [0, 0], sizes = [2, 128], strides = [1, 1]} : vector<2x256xf32> to vector<2x128xf32>
    %205 = arith.negf %204 : vector<2x128xf32>
    %206 = math.exp %205 : vector<2x128xf32>
    %cst_56 = arith.constant 1.000000e+00 : f32
    %207 = vector.broadcast %cst_56 : f32 to vector<2x128xf32>
    %208 = arith.addf %207, %206 : vector<2x128xf32>
    %209 = arith.divf %207, %208 : vector<2x128xf32>
    %210 = vector.extract_strided_slice %203 {offsets = [0, 128], sizes = [2, 64], strides = [1, 1]} : vector<2x256xf32> to vector<2x64xf32>
    %211 = math.tanh %210 : vector<2x64xf32>
    %212 = vector.extract_strided_slice %203 {offsets = [0, 192], sizes = [2, 64], strides = [1, 1]} : vector<2x256xf32> to vector<2x64xf32>
    %213 = arith.negf %212 : vector<2x64xf32>
    %214 = math.exp %213 : vector<2x64xf32>
    %cst_57 = arith.constant 1.000000e+00 : f32
    %215 = vector.broadcast %cst_57 : f32 to vector<2x64xf32>
    %216 = arith.addf %215, %214 : vector<2x64xf32>
    %217 = arith.divf %215, %216 : vector<2x64xf32>
    %218 = vector.extract_strided_slice %209 {offsets = [0, 64], sizes = [2, 64], strides = [1, 1]} : vector<2x128xf32> to vector<2x64xf32>
    %219 = arith.mulf %218, %197 : vector<2x64xf32>
    %220 = vector.extract_strided_slice %209 {offsets = [0, 0], sizes = [2, 64], strides = [1, 1]} : vector<2x128xf32> to vector<2x64xf32>
    %221 = arith.mulf %220, %211 : vector<2x64xf32>
    %222 = arith.addf %219, %221 : vector<2x64xf32>
    %223 = math.tanh %222 : vector<2x64xf32>
    %224 = arith.mulf %217, %223 : vector<2x64xf32>
    %225 = arith.truncf %13 : vector<2x64xf32> to vector<2x64xbf16>
    %c0_58 = arith.constant 0 : index
    %c0_59 = arith.constant 0 : index
    %226 = vector.load %arg10[%c0_58, %c0_59] : memref<64x256xbf16, #tpu.memory_space<vmem>>, vector<64x256xbf16>
    %cst_60 = arith.constant dense<0.000000e+00> : vector<2x256xf32>
    %227 = tpu.matmul %225, %226, %cst_60 {dimension_numbers = #tpu.dot_dimension_numbers<[1], [0], [0], [1], [0, 0, 1, 1], [], []>} : vector<2x64xbf16>, vector<64x256xbf16>, vector<2x256xf32> -> vector<2x256xf32>
    %228 = arith.truncf %224 : vector<2x64xf32> to vector<2x64xbf16>
    %c0_61 = arith.constant 0 : index
    %c0_62 = arith.constant 0 : index
    %229 = vector.load %arg11[%c0_61, %c0_62] : memref<64x256xbf16, #tpu.memory_space<vmem>>, vector<64x256xbf16>
    %cst_63 = arith.constant dense<0.000000e+00> : vector<2x256xf32>
    %230 = tpu.matmul %228, %229, %cst_63 {dimension_numbers = #tpu.dot_dimension_numbers<[1], [0], [0], [1], [0, 0, 1, 1], [], []>} : vector<2x64xbf16>, vector<64x256xbf16>, vector<2x256xf32> -> vector<2x256xf32>
    %231 = arith.addf %227, %230 : vector<2x256xf32>
    %c0_64 = arith.constant 0 : index
    %c0_65 = arith.constant 0 : index
    %232 = vector.load %arg12[%c0_64, %c0_65] : memref<1x256xf32, #tpu.memory_space<vmem>>, vector<1x256xf32>
    %233 = vector.broadcast %232 : vector<1x256xf32> to vector<2x256xf32>
    %234 = arith.addf %231, %233 : vector<2x256xf32>
    %cst_66 = arith.constant 0.000000e+00 : f32
    %235 = vector.broadcast %cst_66 : f32 to vector<2x256xf32>
    %236 = arith.maximumf %234, %235 : vector<2x256xf32>
    %237 = arith.truncf %236 : vector<2x256xf32> to vector<2x256xbf16>
    %c0_67 = arith.constant 0 : index
    %c0_68 = arith.constant 0 : index
    %238 = vector.load %arg13[%c0_67, %c0_68] : memref<256x512xbf16, #tpu.memory_space<vmem>>, vector<256x512xbf16>
    %cst_69 = arith.constant dense<0.000000e+00> : vector<2x512xf32>
    %239 = tpu.matmul %237, %238, %cst_69 {dimension_numbers = #tpu.dot_dimension_numbers<[1], [0], [0], [1], [0, 0, 1, 1], [], []>} : vector<2x256xbf16>, vector<256x512xbf16>, vector<2x512xf32> -> vector<2x512xf32>
    %c0_70 = arith.constant 0 : index
    %c0_71 = arith.constant 0 : index
    %240 = vector.load %arg14[%c0_70, %c0_71] : memref<1x512xf32, #tpu.memory_space<vmem>>, vector<1x512xf32>
    %241 = vector.broadcast %240 : vector<1x512xf32> to vector<2x512xf32>
    %242 = arith.addf %239, %241 : vector<2x512xf32>
    %cst_72 = arith.constant dense<0xFF800000> : vector<2xf32>
    %243 = vector.multi_reduction <maximumf>, %242, %cst_72 [1] : vector<2x512xf32> to vector<2xf32>
    %244 = vector.shape_cast %243 : vector<2xf32> to vector<2x1xf32>
    %245 = vector.broadcast %244 : vector<2x1xf32> to vector<2x512xf32>
    %246 = arith.subf %242, %245 : vector<2x512xf32>
    %247 = math.exp %246 : vector<2x512xf32>
    %cst_73 = arith.constant dense<0.000000e+00> : vector<2xf32>
    %248 = vector.multi_reduction <add>, %247, %cst_73 [1] : vector<2x512xf32> to vector<2xf32>
    %249 = vector.shape_cast %248 : vector<2xf32> to vector<2x1xf32>
    %250 = vector.broadcast %249 : vector<2x1xf32> to vector<2x512xf32>
    %251 = arith.divf %247, %250 : vector<2x512xf32>
    %c0_74 = arith.constant 0 : index
    %c0_75 = arith.constant 0 : index
    %252 = vector.load %arg15[%c0_74, %c0_75] : memref<2x512xf32, #tpu.memory_space<vmem>>, vector<2x512xf32>
    tpu.vector_store %arg15[%c0_74, %c0_75], %251 {strides = array<i32>} : memref<2x512xf32, #tpu.memory_space<vmem>>, vector<2x512xf32>,
    return
  }
  func.func @transform_0(%arg0: i32) -> (i32, i32) {
    %c0_i32 = arith.constant 0 : i32
    %c0_i32_0 = arith.constant 0 : i32
    return %arg0, %c0_i32 : i32, i32
  }
  func.func @transform_1(%arg0: i32) -> (i32, i32, i32) {
    %c0_i32 = arith.constant 0 : i32
    %c0_i32_0 = arith.constant 0 : i32
    %c0_i32_1 = arith.constant 0 : i32
    return %arg0, %c0_i32, %c0_i32_0 : i32, i32, i32
  }
  func.func @transform_2(%arg0: i32) -> (i32, i32) {
    %c0_i32 = arith.constant 0 : i32
    %c0_i32_0 = arith.constant 0 : i32
    %c0_i32_1 = arith.constant 0 : i32
    return %c0_i32, %c0_i32_0 : i32, i32
  }
  func.func @transform_3(%arg0: i32) -> (i32, i32) {
    %c0_i32 = arith.constant 0 : i32
    %c0_i32_0 = arith.constant 0 : i32
    %c0_i32_1 = arith.constant 0 : i32
    return %c0_i32, %c0_i32_0 : i32, i32
  }
  func.func @transform_4(%arg0: i32) -> (i32, i32) {
    %c0_i32 = arith.constant 0 : i32
    %c0_i32_0 = arith.constant 0 : i32
    %c0_i32_1 = arith.constant 0 : i32
    return %c0_i32, %c0_i32_0 : i32, i32
  }
  func.func @transform_5(%arg0: i32) -> (i32, i32) {
    %c0_i32 = arith.constant 0 : i32
    %c0_i32_0 = arith.constant 0 : i32
    %c0_i32_1 = arith.constant 0 : i32
    return %c0_i32, %c0_i32_0 : i32, i32
  }
  func.func @transform_6(%arg0: i32) -> (i32, i32) {
    %c0_i32 = arith.constant 0 : i32
    %c0_i32_0 = arith.constant 0 : i32
    %c0_i32_1 = arith.constant 0 : i32
    return %c0_i32, %c0_i32_0 : i32, i32
  }
  func.func @transform_7(%arg0: i32) -> (i32, i32) {
    %c0_i32 = arith.constant 0 : i32
    %c0_i32_0 = arith.constant 0 : i32
    %c0_i32_1 = arith.constant 0 : i32
    return %c0_i32, %c0_i32_0 : i32, i32
  }
  func.func @transform_8(%arg0: i32) -> (i32, i32) {
    %c0_i32 = arith.constant 0 : i32
    %c0_i32_0 = arith.constant 0 : i32
    %c0_i32_1 = arith.constant 0 : i32
    return %c0_i32, %c0_i32_0 : i32, i32
  }
  func.func @transform_9(%arg0: i32) -> (i32, i32) {
    %c0_i32 = arith.constant 0 : i32
    %c0_i32_0 = arith.constant 0 : i32
    %c0_i32_1 = arith.constant 0 : i32
    return %c0_i32, %c0_i32_0 : i32, i32
  }
  func.func @transform_10(%arg0: i32) -> (i32, i32) {
    %c0_i32 = arith.constant 0 : i32
    %c0_i32_0 = arith.constant 0 : i32
    %c0_i32_1 = arith.constant 0 : i32
    return %c0_i32, %c0_i32_0 : i32, i32
  }
  func.func @transform_11(%arg0: i32) -> (i32, i32) {
    %c0_i32 = arith.constant 0 : i32
    %c0_i32_0 = arith.constant 0 : i32
    %c0_i32_1 = arith.constant 0 : i32
    return %c0_i32, %c0_i32_0 : i32, i32
  }
  func.func @transform_12(%arg0: i32) -> (i32, i32) {
    %c0_i32 = arith.constant 0 : i32
    %c0_i32_0 = arith.constant 0 : i32
    %c0_i32_1 = arith.constant 0 : i32
    return %c0_i32, %c0_i32_0 : i32, i32
  }
  func.func @transform_13(%arg0: i32) -> (i32, i32) {
    %c0_i32 = arith.constant 0 : i32
    %c0_i32_0 = arith.constant 0 : i32
    %c0_i32_1 = arith.constant 0 : i32
    return %c0_i32, %c0_i32_0 : i32, i32
  }
  func.func @transform_14(%arg0: i32) -> (i32, i32) {
    %c0_i32 = arith.constant 0 : i32
    %c0_i32_0 = arith.constant 0 : i32
    return %arg0, %c0_i32 : i32, i32
  }
}

</mosaic_0001>

<llo_original>
// kernel: tpu_custom_call.1
$region0: #{tpu_custom_call.1}
  #allocation0 [shape = 'u32[]', space=smem, size = 0x4, offset = 0x4, fixed_abs, tag = 'smem constant byte address 0x4 - core index']
  #allocation1 [shape = 'u32[144,128]{1,0:T(1,128)}', space=vmem, size = 0x12000, scoped, tag = 'internal scratch']
  #allocation2 [shape = 'f32[16,256]{1,0:T(8,128)}', space=vmem, size = 0x4000, scoped, tag = 'scratch operand']
  %s0 = inlined_call_operand.vmem [shape: bf16[2,512], index: 0, kind: input, shape index: {}]
  %s1 = inlined_call_operand.vmem [shape: bf16[1,16,100], index: 1, kind: input, shape index: {}]
  %s2 = inlined_call_operand.vmem [shape: bf16[512,64], index: 2, kind: input, shape index: {}]
  %s3 = inlined_call_operand.vmem [shape: f32[1,64], index: 3, kind: input, shape index: {}]
  %s4 = inlined_call_operand.vmem [shape: bf16[64,64], index: 4, kind: input, shape index: {}]
  %s5 = inlined_call_operand.vmem [shape: f32[1,64], index: 5, kind: input, shape index: {}]
  %s6 = inlined_call_operand.vmem [shape: bf16[100,256], index: 6, kind: input, shape index: {}]
  %s7 = inlined_call_operand.vmem [shape: bf16[64,256], index: 7, kind: input, shape index: {}]
  %s8 = inlined_call_operand.vmem [shape: f32[1,256], index: 8, kind: input, shape index: {}]
  %s9 = inlined_call_operand.vmem [shape: bf16[64,256], index: 9, kind: input, shape index: {}]
  %s10 = inlined_call_operand.vmem [shape: bf16[64,256], index: 10, kind: input, shape index: {}]
  %s11 = inlined_call_operand.vmem [shape: f32[1,256], index: 11, kind: input, shape index: {}]
  %s12 = inlined_call_operand.hbm [shape: bf16[256,512], index: 12, kind: input, shape index: {}]
  %s13 = inlined_call_operand.vmem [shape: f32[1,512], index: 13, kind: input, shape index: {}]
  %s14 = inlined_call_operand.hbm [shape: f32[2,512], index: 14, kind: output, shape index: {}]
  %s15 = sld [smem:[#allocation0]]
  $region70: #{tpu_custom_call.1} parent=0
    _
  %s17 = ssub.s32 1, %s15
  %s18 = scalar_select 0, %s17, %s15
  $region1: #{tpu_custom_call.1} parent=0
    #allocation3 [shape = 'u8[262144]{0}', space=vmem, size = 0x40000, scoped, tag = 'input window, operand 12, single buffered']
    #allocation4 [shape = 's32[1]{0}', space=sflag, size = 0x4, scoped, tag = 'scoped memory for tpu_custom_call.1']
    #allocation5 [shape = 's32[1]{0}', space=sflag, size = 0x4, scoped, tag = 'scoped memory for tpu_custom_call.1']
    #allocation6 [shape = 'u8[4096]{0}', space=vmem, size = 0x1000, scoped, tag = 'output window, operand 0, single buffered']
    %19 = vsyncpa [#allocation4], 0
    %20 = vsyncpa [#allocation5], 0
    // Predicated region
    $region2: #{tpu_custom_call.1} parent=1 // pred_check
      _
    $region3: #{tpu_custom_call.1} parent=1 // pred_check_branch
      %22 = sbr.rel (0) target = $region5
    $region4: #{tpu_custom_call.1} parent=1 // pred_region
      _
    $region5: #{tpu_custom_call.1} parent=1 // pred_fallthru
      _
    // Predicated region
    $region6: #{tpu_custom_call.1} parent=1 // pred_check
      _
    $region7: #{tpu_custom_call.1} parent=1 // pred_check_branch
      %24 = sbr.rel (0) target = $region9
    $region8: #{tpu_custom_call.1} parent=1 // pred_region
      _
    $region9: #{tpu_custom_call.1} parent=1 // pred_fallthru
      _
    // Predicated region
    $region10: #{tpu_custom_call.1} parent=1 // pred_check
      _
    $region11: #{tpu_custom_call.1} parent=1 // pred_check_branch
      %26 = sbr.rel (0) target = $region13
    $region12: #{tpu_custom_call.1} parent=1 // pred_region
      _
    $region13: #{tpu_custom_call.1} parent=1 // pred_fallthru
      _
    // Predicated region
    $region14: #{tpu_custom_call.1} parent=1 // pred_check
      _
    $region15: #{tpu_custom_call.1} parent=1 // pred_check_branch
      %28 = sbr.rel (0) target = $region17
    $region16: #{tpu_custom_call.1} parent=1 // pred_region
      _
    $region17: #{tpu_custom_call.1} parent=1 // pred_fallthru
      _
    // Predicated region
    $region18: #{tpu_custom_call.1} parent=1 // pred_check
      _
    $region19: #{tpu_custom_call.1} parent=1 // pred_check_branch
      %30 = sbr.rel (0) target = $region21
    $region20: #{tpu_custom_call.1} parent=1 // pred_region
      _
    $region21: #{tpu_custom_call.1} parent=1 // pred_fallthru
      _
    // Predicated region
    $region22: #{tpu_custom_call.1} parent=1 // pred_check
      _
    $region23: #{tpu_custom_call.1} parent=1 // pred_check_branch
      %32 = sbr.rel (0) target = $region25
    $region24: #{tpu_custom_call.1} parent=1 // pred_region
      _
    $region25: #{tpu_custom_call.1} parent=1 // pred_fallthru
      _
    // Predicated region
    $region26: #{tpu_custom_call.1} parent=1 // pred_check
      _
    $region27: #{tpu_custom_call.1} parent=1 // pred_check_branch
      %34 = sbr.rel (0) target = $region29
    $region28: #{tpu_custom_call.1} parent=1 // pred_region
      _
    $region29: #{tpu_custom_call.1} parent=1 // pred_fallthru
      _
    // Predicated region
    $region30: #{tpu_custom_call.1} parent=1 // pred_check
      _
    $region31: #{tpu_custom_call.1} parent=1 // pred_check_branch
      %36 = sbr.rel (0) target = $region33
    $region32: #{tpu_custom_call.1} parent=1 // pred_region
      _
    $region33: #{tpu_custom_call.1} parent=1 // pred_fallthru
      _
    // Predicated region
    $region34: #{tpu_custom_call.1} parent=1 // pred_check
      _
    $region35: #{tpu_custom_call.1} parent=1 // pred_check_branch
      %38 = sbr.rel (0) target = $region37
    $region36: #{tpu_custom_call.1} parent=1 // pred_region
      _
    $region37: #{tpu_custom_call.1} parent=1 // pred_fallthru
      _
    // Predicated region
    $region38: #{tpu_custom_call.1} parent=1 // pred_check
      _
    $region39: #{tpu_custom_call.1} parent=1 // pred_check_branch
      %40 = sbr.rel (0) target = $region41
    $region40: #{tpu_custom_call.1} parent=1 // pred_region
      _
    $region41: #{tpu_custom_call.1} parent=1 // pred_fallthru
      _
    // Predicated region
    $region42: #{tpu_custom_call.1} parent=1 // pred_check
      _
    $region43: #{tpu_custom_call.1} parent=1 // pred_check_branch
      %42 = sbr.rel (0) target = $region45
    $region44: #{tpu_custom_call.1} parent=1 // pred_region
      _
    $region45: #{tpu_custom_call.1} parent=1 // pred_fallthru
      _
    // Predicated region
    $region46: #{tpu_custom_call.1} parent=1 // pred_check
      _
    $region47: #{tpu_custom_call.1} parent=1 // pred_check_branch
      %44 = sbr.rel (0) target = $region49
    $region48: #{tpu_custom_call.1} parent=1 // pred_region
      _
    $region49: #{tpu_custom_call.1} parent=1 // pred_fallthru
      _
    // Predicated region
    $region50: #{tpu_custom_call.1} parent=1 // pred_check
      _
    $region51: #{tpu_custom_call.1} parent=1 // pred_check_branch
      %46 = sbr.rel (0) target = $region53
    $region52: #{tpu_custom_call.1} parent=1 // pred_region
      %s48 = ssub.s32 8192, 8192
      %49 = vsyncadd [#allocation4], %s48
      %s50 = sshll.u32 [#allocation3], 4
      %s51 = int_to_ptr.vmem [resolvable:$true] %s50
      %56 = dma.hbm_to_vmem [thread:$0]  %s12, 8192, %s51, [#allocation4], 256, 256, 16
    $region53: #{tpu_custom_call.1} parent=1 // pred_fallthru
      _
    // Predicated region
    $region54: #{tpu_custom_call.1} parent=1 // pred_check
      _
    $region55: #{tpu_custom_call.1} parent=1 // pred_check_branch
      %58 = sbr.rel (0) target = $region57
    $region56: #{tpu_custom_call.1} parent=1 // pred_region
      _
    $region57: #{tpu_custom_call.1} parent=1 // pred_fallthru
      _
    // Predicated region
    $region58: #{tpu_custom_call.1} parent=1 // pred_check
      _
    $region59: #{tpu_custom_call.1} parent=1 // pred_check_branch
      %60 = sbr.rel (0) target = $region61
    $region60: #{tpu_custom_call.1} parent=1 // pred_region
      %61 = dma.done [#allocation4], 8192
    $region61: #{tpu_custom_call.1} parent=1 // pred_fallthru
      _
    %v63 = vld [vmem:[%s0] sm:$0xf]
    %v64 = vld [vmem:[%s2] sm:$0xf]
    %v65 = vld [vmem:[%s2 + $0x4] sm:$0xf]
    %v66 = vld [vmem:[%s2 + $0x8] sm:$0xf]
    %v67 = vld [vmem:[%s2 + $0xc] sm:$0xf]
    %v68 = vld [vmem:[%s2 + $0x10] sm:$0xf]
    %v69 = vld [vmem:[%s2 + $0x14] sm:$0xf]
    %v70 = vld [vmem:[%s2 + $0x18] sm:$0xf]
    %v71 = vld [vmem:[%s2 + $0x1c] sm:$0xf]
    %v72 = vld [vmem:[%s2 + $0x20] sm:$0xf]
    %v73 = vld [vmem:[%s2 + $0x24] sm:$0xf]
    %v74 = vld [vmem:[%s2 + $0x28] sm:$0xf]
    %v75 = vld [vmem:[%s2 + $0x2c] sm:$0xf]
    %v76 = vld [vmem:[%s2 + $0x30] sm:$0xf]
    %v77 = vld [vmem:[%s2 + $0x34] sm:$0xf]
    %v78 = vld [vmem:[%s2 + $0x38] sm:$0xf]
    %v79 = vld [vmem:[%s2 + $0x3c] sm:$0xf]
    %v80 = vld [vmem:[%s2 + $0x40] sm:$0xf]
    %v81 = vld [vmem:[%s2 + $0x44] sm:$0xf]
    %v82 = vld [vmem:[%s2 + $0x48] sm:$0xf]
    %v83 = vld [vmem:[%s2 + $0x4c] sm:$0xf]
    %v84 = vld [vmem:[%s2 + $0x50] sm:$0xf]
    %v85 = vld [vmem:[%s2 + $0x54] sm:$0xf]
    %v86 = vld [vmem:[%s2 + $0x58] sm:$0xf]
    %v87 = vld [vmem:[%s2 + $0x5c] sm:$0xf]
    %v88 = vld [vmem:[%s2 + $0x60] sm:$0xf]
    %v89 = vld [vmem:[%s2 + $0x64] sm:$0xf]
    %v90 = vld [vmem:[%s2 + $0x68] sm:$0xf]
    %v91 = vld [vmem:[%s2 + $0x6c] sm:$0xf]
    %v92 = vld [vmem:[%s2 + $0x70] sm:$0xf]
    %v93 = vld [vmem:[%s2 + $0x74] sm:$0xf]
    %v94 = vld [vmem:[%s2 + $0x78] sm:$0xf]
    %v95 = vld [vmem:[%s2 + $0x7c] sm:$0xf]
    %v96 = vld [vmem:[%s2 + $0x80] sm:$0xf]
    %v97 = vld [vmem:[%s2 + $0x84] sm:$0xf]
    %v98 = vld [vmem:[%s2 + $0x88] sm:$0xf]
    %v99 = vld [vmem:[%s2 + $0x8c] sm:$0xf]
    %v100 = vld [vmem:[%s2 + $0x90] sm:$0xf]
    %v101 = vld [vmem:[%s2 + $0x94] sm:$0xf]
    %v102 = vld [vmem:[%s2 + $0x98] sm:$0xf]
    %v103 = vld [vmem:[%s2 + $0x9c] sm:$0xf]
    %v104 = vld [vmem:[%s2 + $0xa0] sm:$0xf]
    %v105 = vld [vmem:[%s2 + $0xa4] sm:$0xf]
    %v106 = vld [vmem:[%s2 + $0xa8] sm:$0xf]
    %v107 = vld [vmem:[%s2 + $0xac] sm:$0xf]
    %v108 = vld [vmem:[%s2 + $0xb0] sm:$0xf]
    %v109 = vld [vmem:[%s2 + $0xb4] sm:$0xf]
    %v110 = vld [vmem:[%s2 + $0xb8] sm:$0xf]
    %v111 = vld [vmem:[%s2 + $0xbc] sm:$0xf]
    %v112 = vld [vmem:[%s2 + $0xc0] sm:$0xf]
    %v113 = vld [vmem:[%s2 + $0xc4] sm:$0xf]
    %v114 = vld [vmem:[%s2 + $0xc8] sm:$0xf]
    %v115 = vld [vmem:[%s2 + $0xcc] sm:$0xf]
    %v116 = vld [vmem:[%s2 + $0xd0] sm:$0xf]
    %v117 = vld [vmem:[%s2 + $0xd4] sm:$0xf]
    %v118 = vld [vmem:[%s2 + $0xd8] sm:$0xf]
    %v119 = vld [vmem:[%s2 + $0xdc] sm:$0xf]
    %v120 = vld [vmem:[%s2 + $0xe0] sm:$0xf]
    %v121 = vld [vmem:[%s2 + $0xe4] sm:$0xf]
    %v122 = vld [vmem:[%s2 + $0xe8] sm:$0xf]
    %v123 = vld [vmem:[%s2 + $0xec] sm:$0xf]
    %v124 = vld [vmem:[%s2 + $0xf0] sm:$0xf]
    %v125 = vld [vmem:[%s2 + $0xf4] sm:$0xf]
    %v126 = vld [vmem:[%s2 + $0xf8] sm:$0xf]
    %v127 = vld [vmem:[%s2 + $0xfc] sm:$0xf]
    %v128 = vld [vmem:[%s3] sm:$0x1]
    %v130 = vlaneseq
    %v131 = vshrl.u32 %v130, 7
    %v132 = vsub.s32 0, %v131
    %v133 = vrot.slane %v128, %v132
    %v137 = vunpack.c.l.s4 1966171168
    %v138 = vunpack.c.0.s8 %v137
    %v139 = vlaneseq
    %v140 = vshrl.u32 %v139, 7
    %v141 = vsub.s32 %v138, %v140
    %v142 = vrot.slane %v63, %v141
    %v143 = vcombine.high %v142, %v142
    %v145 = vunpack.c.l.s4 1966171168
    %v146 = vunpack.c.0.s8 %v145
    %v147 = vlaneseq
    %v148 = vshrl.u32 %v147, 7
    %v149 = vsub.s32 %v146, %v148
    %v150 = vrot.slane %v142, %v149
    %v152 = vunpack.c.l.s4 1966171168
    %v153 = vunpack.c.0.s8 %v152
    %v154 = vlaneseq
    %v155 = vshrl.u32 %v154, 7
    %v156 = vsub.s32 %v153, %v155
    %v157 = vrot.slane %v143, %v156
    %v158 = vcombine.high %v150, %v150
    %v159 = vcombine.high %v157, %v157
    %v228 = vunpack.c.l.b16 %v64
    %v229 = vunpack.c.l.b16 %v65
    %v230 = vunpack.c.l.b16 %v66
    %v231 = vunpack.c.l.b16 %v67
    %v232 = vunpack.c.l.b16 %v68
    %v233 = vunpack.c.l.b16 %v69
    %v234 = vunpack.c.l.b16 %v70
    %v235 = vunpack.c.l.b16 %v71
    %v236 = vunpack.c.l.b16 %v72
    %v237 = vunpack.c.l.b16 %v73
    %v238 = vunpack.c.l.b16 %v74
    %v239 = vunpack.c.l.b16 %v75
    %v240 = vunpack.c.l.b16 %v76
    %v241 = vunpack.c.l.b16 %v77
    %v242 = vunpack.c.l.b16 %v78
    %v243 = vunpack.c.l.b16 %v79
    %v244 = vunpack.c.l.b16 %v80
    %v245 = vunpack.c.l.b16 %v81
    %v246 = vunpack.c.l.b16 %v82
    %v247 = vunpack.c.l.b16 %v83
    %v248 = vunpack.c.l.b16 %v84
    %v249 = vunpack.c.l.b16 %v85
    %v250 = vunpack.c.l.b16 %v86
    %v251 = vunpack.c.l.b16 %v87
    %v252 = vunpack.c.l.b16 %v88
    %v253 = vunpack.c.l.b16 %v89
    %v254 = vunpack.c.l.b16 %v90
    %v255 = vunpack.c.l.b16 %v91
    %v256 = vunpack.c.l.b16 %v92
    %v257 = vunpack.c.l.b16 %v93
    %v258 = vunpack.c.l.b16 %v94
    %v259 = vunpack.c.l.b16 %v95
    %v260 = vunpack.c.l.b16 %v96
    %v261 = vunpack.c.l.b16 %v97
    %v262 = vunpack.c.l.b16 %v98
    %v263 = vunpack.c.l.b16 %v99
    %v264 = vunpack.c.l.b16 %v100
    %v265 = vunpack.c.l.b16 %v101
    %v266 = vunpack.c.l.b16 %v102
    %v267 = vunpack.c.l.b16 %v103
    %v268 = vunpack.c.l.b16 %v104
    %v269 = vunpack.c.l.b16 %v105
    %v270 = vunpack.c.l.b16 %v106
    %v271 = vunpack.c.l.b16 %v107
    %v272 = vunpack.c.l.b16 %v108
    %v273 = vunpack.c.l.b16 %v109
    %v274 = vunpack.c.l.b16 %v110
    %v275 = vunpack.c.l.b16 %v111
    %v276 = vunpack.c.l.b16 %v112
    %v277 = vunpack.c.l.b16 %v113
    %v278 = vunpack.c.l.b16 %v114
    %v279 = vunpack.c.l.b16 %v115
    %v280 = vunpack.c.l.b16 %v116
    %v281 = vunpack.c.l.b16 %v117
    %v282 = vunpack.c.l.b16 %v118
    %v283 = vunpack.c.l.b16 %v119
    %v284 = vunpack.c.l.b16 %v120
    %v285 = vunpack.c.l.b16 %v121
    %v286 = vunpack.c.l.b16 %v122
    %v287 = vunpack.c.l.b16 %v123
    %v288 = vunpack.c.l.b16 %v124
    %v289 = vunpack.c.l.b16 %v125
    %v290 = vunpack.c.l.b16 %v126
    %v291 = vunpack.c.l.b16 %v127
    %v292 = vpack.c.b16 %v229, %v228
    %v293 = vpack.c.b16 %v231, %v230
    %v294 = vpack.c.b16 %v233, %v232
    %v295 = vpack.c.b16 %v235, %v234
    %v296 = vpack.c.b16 %v237, %v236
    %v297 = vpack.c.b16 %v239, %v238
    %v298 = vpack.c.b16 %v241, %v240
    %v299 = vpack.c.b16 %v243, %v242
    %v300 = vpack.c.b16 %v245, %v244
    %v301 = vpack.c.b16 %v247, %v246
    %v302 = vpack.c.b16 %v249, %v248
    %v303 = vpack.c.b16 %v251, %v250
    %v304 = vpack.c.b16 %v253, %v252
    %v305 = vpack.c.b16 %v255, %v254
    %v306 = vpack.c.b16 %v257, %v256
    %v307 = vpack.c.b16 %v259, %v258
    %v308 = vpack.c.b16 %v261, %v260
    %v309 = vpack.c.b16 %v263, %v262
    %v310 = vpack.c.b16 %v265, %v264
    %v311 = vpack.c.b16 %v267, %v266
    %v312 = vpack.c.b16 %v269, %v268
    %v313 = vpack.c.b16 %v271, %v270
    %v314 = vpack.c.b16 %v273, %v272
    %v315 = vpack.c.b16 %v275, %v274
    %v316 = vpack.c.b16 %v277, %v276
    %v317 = vpack.c.b16 %v279, %v278
    %v318 = vpack.c.b16 %v281, %v280
    %v319 = vpack.c.b16 %v283, %v282
    %v320 = vpack.c.b16 %v285, %v284
    %v321 = vpack.c.b16 %v287, %v286
    %v322 = vpack.c.b16 %v289, %v288
    %v323 = vpack.c.b16 %v291, %v290
    %356 = vmatprep.subr.bf16.mxu0 0
    %357 = vmatpush1.bf16.msra.mxu0 %v292
    %358 = vmatprep.subr.bf16.mxu0 0
    %359 = vmatpush1.bf16.msra.mxu0 %v293
    %360 = vmatprep.subr.bf16.mxu0 0
    %361 = vmatpush1.bf16.msra.mxu0 %v294
    %362 = vmatprep.subr.bf16.mxu0 0
    %363 = vmatpush1.bf16.msra.mxu0 %v295
    %364 = vmatprep.subr.bf16.mxu0 0
    %365 = vmatpush1.bf16.msra.mxu0 %v296
    %366 = vmatprep.subr.bf16.mxu0 0
    %367 = vmatpush1.bf16.msra.mxu0 %v297
    %368 = vmatprep.subr.bf16.mxu0 0
    %369 = vmatpush1.bf16.msra.mxu0 %v298
    %370 = vmatprep.subr.bf16.mxu0 0
    %371 = vmatpush1.bf16.msra.mxu0 %v299
    %372 = vmatprep.subr.bf16.mxu0 0
    %373 = vmatpush1.bf16.msra.mxu0 %v300
    %374 = vmatprep.subr.bf16.mxu0 0
    %375 = vmatpush1.bf16.msra.mxu0 %v301
    %376 = vmatprep.subr.bf16.mxu0 0
    %377 = vmatpush1.bf16.msra.mxu0 %v302
    %378 = vmatprep.subr.bf16.mxu0 0
    %379 = vmatpush1.bf16.msra.mxu0 %v303
    %380 = vmatprep.subr.bf16.mxu0 0
    %381 = vmatpush1.bf16.msra.mxu0 %v304
    %382 = vmatprep.subr.bf16.mxu0 0
    %383 = vmatpush1.bf16.msra.mxu0 %v305
    %384 = vmatprep.subr.bf16.mxu0 0
    %385 = vmatpush1.bf16.msra.mxu0 %v306
    %386 = vmatprep.subr.bf16.mxu0 0
    %387 = vmatpush1.bf16.msra.mxu0 %v307
    %388 = vmatprep.mubr.bf16.mxu0 %v157
    %389 = vmatmul.mubr.bf16.gmra.mrb[0].mxu0 %v150
    %v390 = vpop.f32.mrb[0].mxu0
    %v391 = vadd.f32 %v133, %v390
    %v392 = vpop.f32.mrb[0].mxu0
    %v393 = vpop.f32.mrb[0].mxu0
    %v394 = vpop.f32.mrb[0].mxu0
    %395 = vdwg.mxu0
    %396 = vmatprep.subr.bf16.mxu0 0
    %397 = vmatpush1.bf16.msra.mxu0 %v308
    %398 = vmatprep.subr.bf16.mxu0 0
    %399 = vmatpush1.bf16.msra.mxu0 %v309
    %400 = vmatprep.subr.bf16.mxu0 0
    %401 = vmatpush1.bf16.msra.mxu0 %v310
    %402 = vmatprep.subr.bf16.mxu0 0
    %403 = vmatpush1.bf16.msra.mxu0 %v311
    %404 = vmatprep.subr.bf16.mxu0 0
    %405 = vmatpush1.bf16.msra.mxu0 %v312
    %406 = vmatprep.subr.bf16.mxu0 0
    %407 = vmatpush1.bf16.msra.mxu0 %v313
    %408 = vmatprep.subr.bf16.mxu0 0
    %409 = vmatpush1.bf16.msra.mxu0 %v314
    %410 = vmatprep.subr.bf16.mxu0 0
    %411 = vmatpush1.bf16.msra.mxu0 %v315
    %412 = vmatprep.subr.bf16.mxu0 0
    %413 = vmatpush1.bf16.msra.mxu0 %v316
    %414 = vmatprep.subr.bf16.mxu0 0
    %415 = vmatpush1.bf16.msra.mxu0 %v317
    %416 = vmatprep.subr.bf16.mxu0 0
    %417 = vmatpush1.bf16.msra.mxu0 %v318
    %418 = vmatprep.subr.bf16.mxu0 0
    %419 = vmatpush1.bf16.msra.mxu0 %v319
    %420 = vmatprep.subr.bf16.mxu0 0
    %421 = vmatpush1.bf16.msra.mxu0 %v320
    %422 = vmatprep.subr.bf16.mxu0 0
    %423 = vmatpush1.bf16.msra.mxu0 %v321
    %424 = vmatprep.subr.bf16.mxu0 0
    %425 = vmatpush1.bf16.msra.mxu0 %v322
    %426 = vmatprep.subr.bf16.mxu0 0
    %427 = vmatpush1.bf16.msra.mxu0 %v323
    %428 = vmatprep.mubr.bf16.mxu0 %v159
    %429 = vmatmul.mubr.bf16.gmra.mrb[0].mxu0 %v158
    %v430 = vpop.f32.mrb[0].mxu0
    %v431 = vadd.f32 %v391, %v430
    %v432 = vpop.f32.mrb[0].mxu0
    %v433 = vpop.f32.mrb[0].mxu0
    %v434 = vpop.f32.mrb[0].mxu0
    %435 = vdwg.mxu0
    %v436 = vmax.f32 %v431, 0.0
    %v437 = vpack.c.bf16 %v436, %v436
    %v438 = vld [vmem:[%s4] sm:$0xf]
    %v439 = vld [vmem:[%s4 + $0x4] sm:$0xf]
    %v440 = vld [vmem:[%s4 + $0x8] sm:$0xf]
    %v441 = vld [vmem:[%s4 + $0xc] sm:$0xf]
    %v442 = vld [vmem:[%s4 + $0x10] sm:$0xf]
    %v443 = vld [vmem:[%s4 + $0x14] sm:$0xf]
    %v444 = vld [vmem:[%s4 + $0x18] sm:$0xf]
    %v445 = vld [vmem:[%s4 + $0x1c] sm:$0xf]
    %v446 = vld [vmem:[%s5] sm:$0x1]
    %v448 = vlaneseq
    %v449 = vshrl.u32 %v448, 7
    %v450 = vsub.s32 0, %v449
    %v451 = vrot.slane %v446, %v450
    %v461 = vunpack.c.l.b16 %v438
    %v462 = vunpack.c.l.b16 %v439
    %v463 = vunpack.c.l.b16 %v440
    %v464 = vunpack.c.l.b16 %v441
    %v465 = vunpack.c.l.b16 %v442
    %v466 = vunpack.c.l.b16 %v443
    %v467 = vunpack.c.l.b16 %v444
    %v468 = vunpack.c.l.b16 %v445
    %v469 = vpack.c.b16 %v462, %v461
    %v470 = vpack.c.b16 %v464, %v463
    %v471 = vpack.c.b16 %v466, %v465
    %v472 = vpack.c.b16 %v468, %v467
    %vm477 = vcmask 523264
    %v479 = vsel %vm477, %v437, 0
    %481 = vmatprep.subr.bf16.mxu0 0
    %482 = vmatpush1.bf16.msra.mxu0 %v469
    %483 = vmatprep.subr.bf16.mxu0 0
    %484 = vmatpush1.bf16.msra.mxu0 %v470
    %485 = vmatprep.subr.bf16.mxu0 0
    %486 = vmatpush1.bf16.msra.mxu0 %v471
    %487 = vmatprep.subr.bf16.mxu0 0
    %488 = vmatpush1.bf16.msra.mxu0 %v472
    %489 = vmatprep.subr.bf16.mxu0 0
    %490 = vmatpush1.bf16.msra.mxu0 0
    %491 = vmatprep.subr.bf16.mxu0 0
    %492 = vmatpush1.bf16.msra.mxu0 0
    %493 = vmatprep.subr.bf16.mxu0 0
    %494 = vmatpush1.bf16.msra.mxu0 0
    %495 = vmatprep.subr.bf16.mxu0 0
    %496 = vmatpush1.bf16.msra.mxu0 0
    %497 = vmatprep.subr.bf16.mxu0 0
    %498 = vmatpush1.bf16.msra.mxu0 0
    %499 = vmatprep.subr.bf16.mxu0 0
    %500 = vmatpush1.bf16.msra.mxu0 0
    %501 = vmatprep.subr.bf16.mxu0 0
    %502 = vmatpush1.bf16.msra.mxu0 0
    %503 = vmatprep.subr.bf16.mxu0 0
    %504 = vmatpush1.bf16.msra.mxu0 0
    %505 = vmatprep.subr.bf16.mxu0 0
    %506 = vmatpush1.bf16.msra.mxu0 0
    %507 = vmatprep.subr.bf16.mxu0 0
    %508 = vmatpush1.bf16.msra.mxu0 0
    %509 = vmatprep.subr.bf16.mxu0 0
    %510 = vmatpush1.bf16.msra.mxu0 0
    %511 = vmatprep.subr.bf16.mxu0 0
    %512 = vmatpush1.bf16.msra.mxu0 0
    %513 = vmatprep.mubr.bf16.mxu0 0
    %514 = vmatmul.mubr.bf16.gmra.mrb[0].mxu0 %v479
    %v515 = vpop.f32.mrb[0].mxu0
    %v516 = vadd.f32 %v451, %v515
    %v517 = vpop.f32.mrb[0].mxu0
    %v518 = vpop.f32.mrb[0].mxu0
    %v519 = vpop.f32.mrb[0].mxu0
    %520 = vdwg.mxu0
    %v521 = vld [vmem:[%s1] sm:$0xf]
    %v522 = vld [vmem:[%s1 + $0x4] sm:$0xf]
    %v523 = vld [vmem:[%s6] sm:$0xff]
    %v524 = vld [vmem:[%s6 + $0x8] sm:$0xff]
    %v525 = vld [vmem:[%s6 + $0x10] sm:$0xff]
    %v526 = vld [vmem:[%s6 + $0x18] sm:$0xff]
    %v527 = vld [vmem:[%s6 + $0x20] sm:$0xff]
    %v528 = vld [vmem:[%s6 + $0x28] sm:$0xff]
    %v529 = vld [vmem:[%s6 + $0x30] sm:$0xff]
    %v530 = vld [vmem:[%s6 + $0x38] sm:$0xff]
    %v531 = vld [vmem:[%s6 + $0x40] sm:$0xff]
    %v532 = vld [vmem:[%s6 + $0x48] sm:$0xff]
    %v533 = vld [vmem:[%s6 + $0x50] sm:$0xff]
    %v534 = vld [vmem:[%s6 + $0x58] sm:$0xff]
    %v535 = vld [vmem:[%s6 + $0x60] sm:$0x33]
    %v536 = vld [vmem:[%s8] sm:$0x3]
    %v538 = vlaneseq
    %v539 = vshrl.u32 %v538, 7
    %v540 = vsub.s32 0, %v539
    %v541 = vrot.slane %v536, %v540
    %v542 = vlaneseq
    %v543 = vshrl.u32 %v542, 7
    %v544 = vsub.s32 1, %v543
    %v545 = vrot.slane %v536, %v544
    %v550 = vunpack.c.l.b16 %v521
    %v551 = vunpack.c.l.b16 %v522
    %v552 = vpack.c.b16 %v551, %v550
    %v566 = vunpack.c.l.b16 %v523
    %v567 = vunpack.c.h.b16 %v523
    %v568 = vunpack.c.l.b16 %v524
    %v569 = vunpack.c.h.b16 %v524
    %v570 = vunpack.c.l.b16 %v525
    %v571 = vunpack.c.h.b16 %v525
    %v572 = vunpack.c.l.b16 %v526
    %v573 = vunpack.c.h.b16 %v526
    %v574 = vunpack.c.l.b16 %v527
    %v575 = vunpack.c.h.b16 %v527
    %v576 = vunpack.c.l.b16 %v528
    %v577 = vunpack.c.h.b16 %v528
    %v578 = vunpack.c.l.b16 %v529
    %v579 = vunpack.c.h.b16 %v529
    %v580 = vunpack.c.l.b16 %v530
    %v581 = vunpack.c.h.b16 %v530
    %v582 = vunpack.c.l.b16 %v531
    %v583 = vunpack.c.h.b16 %v531
    %v584 = vunpack.c.l.b16 %v532
    %v585 = vunpack.c.h.b16 %v532
    %v586 = vunpack.c.l.b16 %v533
    %v587 = vunpack.c.h.b16 %v533
    %v588 = vunpack.c.l.b16 %v534
    %v589 = vunpack.c.h.b16 %v534
    %v590 = vunpack.c.l.b16 %v535
    %v591 = vunpack.c.h.b16 %v535
    %v592 = vpack.c.b16 %v568, %v566
    %v593 = vpack.c.b16 %v569, %v567
    %v594 = vpack.c.b16 %v572, %v570
    %v595 = vpack.c.b16 %v573, %v571
    %v596 = vpack.c.b16 %v576, %v574
    %v597 = vpack.c.b16 %v577, %v575
    %v598 = vpack.c.b16 %v580, %v578
    %v599 = vpack.c.b16 %v581, %v579
    %v600 = vpack.c.b16 %v584, %v582
    %v601 = vpack.c.b16 %v585, %v583
    %v602 = vpack.c.b16 %v588, %v586
    %v603 = vpack.c.b16 %v589, %v587
    %v604 = vpack.c.b16 %v590, %v590
    %v605 = vpack.c.b16 %v591, %v591
    %vm618 = vcmask 818176
    %v620 = vsel %vm618, %v552, 0
    %vm622 = vcmask 1041408
    %v624 = vsel %vm622, %v604, 0
    %v627 = vsel %vm622, %v605, 0
    %629 = vmatprep.subr.bf16.mxu0 %v593
    %630 = vmatpush1.bf16.msra.mxu0 %v592
    %631 = vmatprep.subr.bf16.mxu0 %v595
    %632 = vmatpush1.bf16.msra.mxu0 %v594
    %633 = vmatprep.subr.bf16.mxu0 %v597
    %634 = vmatpush1.bf16.msra.mxu0 %v596
    %635 = vmatprep.subr.bf16.mxu0 %v599
    %636 = vmatpush1.bf16.msra.mxu0 %v598
    %637 = vmatprep.subr.bf16.mxu0 %v601
    %638 = vmatpush1.bf16.msra.mxu0 %v600
    %639 = vmatprep.subr.bf16.mxu0 %v603
    %640 = vmatpush1.bf16.msra.mxu0 %v602
    %641 = vmatprep.subr.bf16.mxu0 %v627
    %642 = vmatpush1.bf16.msra.mxu0 %v624
    %643 = vmatprep.subr.bf16.mxu0 0
    %644 = vmatpush1.bf16.msra.mxu0 0
    %645 = vmatprep.subr.bf16.mxu0 0
    %646 = vmatpush1.bf16.msra.mxu0 0
    %647 = vmatprep.subr.bf16.mxu0 0
    %648 = vmatpush1.bf16.msra.mxu0 0
    %649 = vmatprep.subr.bf16.mxu0 0
    %650 = vmatpush1.bf16.msra.mxu0 0
    %651 = vmatprep.subr.bf16.mxu0 0
    %652 = vmatpush1.bf16.msra.mxu0 0
    %653 = vmatprep.subr.bf16.mxu0 0
    %654 = vmatpush1.bf16.msra.mxu0 0
    %655 = vmatprep.subr.bf16.mxu0 0
    %656 = vmatpush1.bf16.msra.mxu0 0
    %657 = vmatprep.subr.bf16.mxu0 0
    %658 = vmatpush1.bf16.msra.mxu0 0
    %659 = vmatprep.subr.bf16.mxu0 0
    %660 = vmatpush1.bf16.msra.mxu0 0
    %661 = vmatprep.mubr.bf16.mxu0 0
    %662 = vmatmul.mubr.bf16.gmra.mrb[0].mxu0 %v620
    %v663 = vpop.f32.mrb[0].mxu0
    %v664 = vadd.f32 %v541, %v663
    %v665 = vpop.f32.mrb[0].mxu0
    %v666 = vadd.f32 %v545, %v665
    %v667 = vpop.f32.mrb[0].mxu0
    %v668 = vadd.f32 %v541, %v667
    %v669 = vpop.f32.mrb[0].mxu0
    %v670 = vadd.f32 %v545, %v669
    %671 = vdwg.mxu0
    %672 = vst [vmem:[#allocation2] sm:$0xff] %v664
    %673 = vst [vmem:[#allocation2 + $0x8] sm:$0xff] %v666
    %674 = vst [vmem:[#allocation2 + $0x10] sm:$0xff] %v668
    %675 = vst [vmem:[#allocation2 + $0x18] sm:$0xff] %v670
    %v676 = vld [vmem:[%s7] sm:$0xff]
    %v677 = vld [vmem:[%s7 + $0x8] sm:$0xff]
    %v678 = vld [vmem:[%s7 + $0x10] sm:$0xff]
    %v679 = vld [vmem:[%s7 + $0x18] sm:$0xff]
    %v680 = vld [vmem:[%s7 + $0x20] sm:$0xff]
    %v681 = vld [vmem:[%s7 + $0x28] sm:$0xff]
    %v682 = vld [vmem:[%s7 + $0x30] sm:$0xff]
    %v683 = vld [vmem:[%s7 + $0x38] sm:$0xff]
    %v684 = vld [vmem:[#allocation2] sm:$0x3]
    %v685 = vld [vmem:[#allocation2 + $0x8] sm:$0x3]
    %v694 = vunpack.c.l.b16 %v676
    %v695 = vunpack.c.h.b16 %v676
    %v696 = vunpack.c.l.b16 %v677
    %v697 = vunpack.c.h.b16 %v677
    %v698 = vunpack.c.l.b16 %v678
    %v699 = vunpack.c.h.b16 %v678
    %v700 = vunpack.c.l.b16 %v679
    %v701 = vunpack.c.h.b16 %v679
    %v702 = vunpack.c.l.b16 %v680
    %v703 = vunpack.c.h.b16 %v680
    %v704 = vunpack.c.l.b16 %v681
    %v705 = vunpack.c.h.b16 %v681
    %v706 = vunpack.c.l.b16 %v682
    %v707 = vunpack.c.h.b16 %v682
    %v708 = vunpack.c.l.b16 %v683
    %v709 = vunpack.c.h.b16 %v683
    %v710 = vpack.c.b16 %v696, %v694
    %v711 = vpack.c.b16 %v697, %v695
    %v712 = vpack.c.b16 %v700, %v698
    %v713 = vpack.c.b16 %v701, %v699
    %v714 = vpack.c.b16 %v704, %v702
    %v715 = vpack.c.b16 %v705, %v703
    %v716 = vpack.c.b16 %v708, %v706
    %v717 = vpack.c.b16 %v709, %v707
    %v727 = vsel %vm477, 0, 0
    %729 = vmatprep.subr.bf16.mxu0 %v711
    %730 = vmatpush1.bf16.msra.mxu0 %v710
    %731 = vmatprep.subr.bf16.mxu0 %v713
    %732 = vmatpush1.bf16.msra.mxu0 %v712
    %733 = vmatprep.subr.bf16.mxu0 %v715
    %734 = vmatpush1.bf16.msra.mxu0 %v714
    %735 = vmatprep.subr.bf16.mxu0 %v717
    %736 = vmatpush1.bf16.msra.mxu0 %v716
    %737 = vmatprep.subr.bf16.mxu0 0
    %738 = vmatpush1.bf16.msra.mxu0 0
    %739 = vmatprep.subr.bf16.mxu0 0
    %740 = vmatpush1.bf16.msra.mxu0 0
    %741 = vmatprep.subr.bf16.mxu0 0
    %742 = vmatpush1.bf16.msra.mxu0 0
    %743 = vmatprep.subr.bf16.mxu0 0
    %744 = vmatpush1.bf16.msra.mxu0 0
    %745 = vmatprep.subr.bf16.mxu0 0
    %746 = vmatpush1.bf16.msra.mxu0 0
    %747 = vmatprep.subr.bf16.mxu0 0
    %748 = vmatpush1.bf16.msra.mxu0 0
    %749 = vmatprep.subr.bf16.mxu0 0
    %750 = vmatpush1.bf16.msra.mxu0 0
    %751 = vmatprep.subr.bf16.mxu0 0
    %752 = vmatpush1.bf16.msra.mxu0 0
    %753 = vmatprep.subr.bf16.mxu0 0
    %754 = vmatpush1.bf16.msra.mxu0 0
    %755 = vmatprep.subr.bf16.mxu0 0
    %756 = vmatpush1.bf16.msra.mxu0 0
    %757 = vmatprep.subr.bf16.mxu0 0
    %758 = vmatpush1.bf16.msra.mxu0 0
    %759 = vmatprep.subr.bf16.mxu0 0
    %760 = vmatpush1.bf16.msra.mxu0 0
    %761 = vmatprep.mubr.bf16.mxu0 0
    %762 = vmatmul.mubr.bf16.gmra.mrb[0].mxu0 %v727
    %v763 = vpop.f32.mrb[0].mxu0
    %v764 = vadd.f32 0.0, %v763
    %v765 = vpop.f32.mrb[0].mxu0
    %v766 = vadd.f32 0.0, %v765
    %v767 = vpop.f32.mrb[0].mxu0
    %v768 = vpop.f32.mrb[0].mxu0
    %769 = vdwg.mxu0
    %v770 = vadd.f32 %v684, %v764
    %v771 = vadd.f32 %v685, %v766
    %v772 = vxor.u32 %v770, 2147483648
    %v773 = vmul.f32 %v772, 1.442695
    %v774 = vpow.pop %v773
    %v775 = vadd.f32 %v774, 1.0
    %v776 = vrcp.pop %v775
    %v777 = vmul.f32 1.0, %v776
    %v778 = vtanh.pop %v771
    %v779 = vxor.u32 %v771, 2147483648
    %v780 = vmul.f32 %v779, 1.442695
    %v781 = vpow.pop %v780
    %v782 = vadd.f32 %v781, 1.0
    %v783 = vrcp.pop %v782
    %v784 = vmul.f32 1.0, %v783
    %v785 = vmul.f32 %v777, 0.0
    %v786 = vmul.f32 %v777, %v778
    %788 = vrot.lane.b32.xlu0 %v786, 64
    %v789 = vpop.permute.xlu0 %788
    %v791 = vadd.f32 %v785, %v789
    %v792 = vtanh.pop %v791
    %v793 = vmul.f32 %v784, %v792
    %v794 = vld [vmem:[#allocation2] sm:$0xc]
    %v795 = vld [vmem:[#allocation2 + $0x8] sm:$0xc]
    %v796 = vpack.c.bf16 %v793, %v793
    %798 = vrot.lane.b32.xlu0 %v796, 64
    %v799 = vpop.permute.xlu0 %798
    %v801 = vsel %vm477, %v799, 0
    %803 = vmatprep.subr.bf16.mxu0 %v711
    %804 = vmatpush1.bf16.msra.mxu0 %v710
    %805 = vmatprep.subr.bf16.mxu0 %v713
    %806 = vmatpush1.bf16.msra.mxu0 %v712
    %807 = vmatprep.subr.bf16.mxu0 %v715
    %808 = vmatpush1.bf16.msra.mxu0 %v714
    %809 = vmatprep.subr.bf16.mxu0 %v717
    %810 = vmatpush1.bf16.msra.mxu0 %v716
    %811 = vmatprep.subr.bf16.mxu0 0
    %812 = vmatpush1.bf16.msra.mxu0 0
    %813 = vmatprep.subr.bf16.mxu0 0
    %814 = vmatpush1.bf16.msra.mxu0 0
    %815 = vmatprep.subr.bf16.mxu0 0
    %816 = vmatpush1.bf16.msra.mxu0 0
    %817 = vmatprep.subr.bf16.mxu0 0
    %818 = vmatpush1.bf16.msra.mxu0 0
    %819 = vmatprep.subr.bf16.mxu0 0
    %820 = vmatpush1.bf16.msra.mxu0 0
    %821 = vmatprep.subr.bf16.mxu0 0
    %822 = vmatpush1.bf16.msra.mxu0 0
    %823 = vmatprep.subr.bf16.mxu0 0
    %824 = vmatpush1.bf16.msra.mxu0 0
    %825 = vmatprep.subr.bf16.mxu0 0
    %826 = vmatpush1.bf16.msra.mxu0 0
    %827 = vmatprep.subr.bf16.mxu0 0
    %828 = vmatpush1.bf16.msra.mxu0 0
    %829 = vmatprep.subr.bf16.mxu0 0
    %830 = vmatpush1.bf16.msra.mxu0 0
    %831 = vmatprep.subr.bf16.mxu0 0
    %832 = vmatpush1.bf16.msra.mxu0 0
    %833 = vmatprep.subr.bf16.mxu0 0
    %834 = vmatpush1.bf16.msra.mxu0 0
    %835 = vmatprep.mubr.bf16.mxu0 0
    %836 = vmatmul.mubr.bf16.gmra.mrb[0].mxu0 %v801
    %v837 = vpop.f32.mrb[0].mxu0
    %v838 = vadd.f32 0.0, %v837
    %v839 = vpop.f32.mrb[0].mxu0
    %v840 = vadd.f32 0.0, %v839
    %v841 = vpop.f32.mrb[0].mxu0
    %v842 = vpop.f32.mrb[0].mxu0
    %843 = vdwg.mxu0
    %v846 = vrot.slane %v838, 6
    %v847 = vrot.slane %v840, 6
    %v850 = vadd.f32 %v794, %v846
    %v851 = vadd.f32 %v795, %v847
    %v852 = vxor.u32 %v850, 2147483648
    %v853 = vmul.f32 %v852, 1.442695
    %v854 = vpow.pop %v853
    %v855 = vadd.f32 %v854, 1.0
    %v856 = vrcp.pop %v855
    %v857 = vmul.f32 1.0, %v856
    %v858 = vtanh.pop %v851
    %v859 = vxor.u32 %v851, 2147483648
    %v860 = vmul.f32 %v859, 1.442695
    %v861 = vpow.pop %v860
    %v862 = vadd.f32 %v861, 1.0
    %v863 = vrcp.pop %v862
    %v864 = vmul.f32 1.0, %v863
    %v866 = vrot.slane %v791, 6
    %v868 = vmul.f32 %v857, %v866
    %v869 = vmul.f32 %v857, %v858
    %871 = vrot.lane.b32.xlu0 %v869, 64
    %v872 = vpop.permute.xlu0 %871
    %v874 = vadd.f32 %v868, %v872
    %v875 = vtanh.pop %v874
    %v876 = vmul.f32 %v864, %v875
    %v877 = vld [vmem:[#allocation2] sm:$0x30]
    %v878 = vld [vmem:[#allocation2 + $0x8] sm:$0x30]
    %v879 = vpack.c.bf16 %v876, %v876
    %v881 = vrot.slane %v879, 1
    %882 = vrot.lane.b32.xlu0 %v881, 64
    %v883 = vpop.permute.xlu0 %882
    %v885 = vsel %vm477, %v883, 0
    %887 = vmatprep.subr.bf16.mxu0 %v711
    %888 = vmatpush1.bf16.msra.mxu0 %v710
    %889 = vmatprep.subr.bf16.mxu0 %v713
    %890 = vmatpush1.bf16.msra.mxu0 %v712
    %891 = vmatprep.subr.bf16.mxu0 %v715
    %892 = vmatpush1.bf16.msra.mxu0 %v714
    %893 = vmatprep.subr.bf16.mxu0 %v717
    %894 = vmatpush1.bf16.msra.mxu0 %v716
    %895 = vmatprep.subr.bf16.mxu0 0
    %896 = vmatpush1.bf16.msra.mxu0 0
    %897 = vmatprep.subr.bf16.mxu0 0
    %898 = vmatpush1.bf16.msra.mxu0 0
    %899 = vmatprep.subr.bf16.mxu0 0
    %900 = vmatpush1.bf16.msra.mxu0 0
    %901 = vmatprep.subr.bf16.mxu0 0
    %902 = vmatpush1.bf16.msra.mxu0 0
    %903 = vmatprep.subr.bf16.mxu0 0
    %904 = vmatpush1.bf16.msra.mxu0 0
    %905 = vmatprep.subr.bf16.mxu0 0
    %906 = vmatpush1.bf16.msra.mxu0 0
    %907 = vmatprep.subr.bf16.mxu0 0
    %908 = vmatpush1.bf16.msra.mxu0 0
    %909 = vmatprep.subr.bf16.mxu0 0
    %910 = vmatpush1.bf16.msra.mxu0 0
    %911 = vmatprep.subr.bf16.mxu0 0
    %912 = vmatpush1.bf16.msra.mxu0 0
    %913 = vmatprep.subr.bf16.mxu0 0
    %914 = vmatpush1.bf16.msra.mxu0 0
    %915 = vmatprep.subr.bf16.mxu0 0
    %916 = vmatpush1.bf16.msra.mxu0 0
    %917 = vmatprep.subr.bf16.mxu0 0
    %918 = vmatpush1.bf16.msra.mxu0 0
    %919 = vmatprep.mubr.bf16.mxu0 0
    %920 = vmatmul.mubr.bf16.gmra.mrb[0].mxu0 %v885
    %v921 = vpop.f32.mrb[0].mxu0
    %v922 = vadd.f32 0.0, %v921
    %v923 = vpop.f32.mrb[0].mxu0
    %v924 = vadd.f32 0.0, %v923
    %v925 = vpop.f32.mrb[0].mxu0
    %v926 = vpop.f32.mrb[0].mxu0
    %927 = vdwg.mxu0
    %v930 = vrot.slane %v922, 4
    %v931 = vrot.slane %v924, 4
    %v934 = vadd.f32 %v877, %v930
    %v935 = vadd.f32 %v878, %v931
    %v936 = vxor.u32 %v934, 2147483648
    %v937 = vmul.f32 %v936, 1.442695
    %v938 = vpow.pop %v937
    %v939 = vadd.f32 %v938, 1.0
    %v940 = vrcp.pop %v939
    %v941 = vmul.f32 1.0, %v940
    %v942 = vtanh.pop %v935
    %v943 = vxor.u32 %v935, 2147483648
    %v944 = vmul.f32 %v943, 1.442695
    %v945 = vpow.pop %v944
    %v946 = vadd.f32 %v945, 1.0
    %v947 = vrcp.pop %v946
    %v948 = vmul.f32 1.0, %v947
    %v950 = vrot.slane %v874, 6
    %v952 = vmul.f32 %v941, %v950
    %v953 = vmul.f32 %v941, %v942
    %955 = vrot.lane.b32.xlu0 %v953, 64
    %v956 = vpop.permute.xlu0 %955
    %v958 = vadd.f32 %v952, %v956
    %v959 = vtanh.pop %v958
    %v960 = vmul.f32 %v948, %v959
    %v961 = vld [vmem:[#allocation2] sm:$0xc0]
    %v962 = vld [vmem:[#allocation2 + $0x8] sm:$0xc0]
    %v963 = vpack.c.bf16 %v960, %v960
    %v965 = vrot.slane %v963, 2
    %966 = vrot.lane.b32.xlu0 %v965, 64
    %v967 = vpop.permute.xlu0 %966
    %v969 = vsel %vm477, %v967, 0
    %971 = vmatprep.subr.bf16.mxu0 %v711
    %972 = vmatpush1.bf16.msra.mxu0 %v710
    %973 = vmatprep.subr.bf16.mxu0 %v713
    %974 = vmatpush1.bf16.msra.mxu0 %v712
    %975 = vmatprep.subr.bf16.mxu0 %v715
    %976 = vmatpush1.bf16.msra.mxu0 %v714
    %977 = vmatprep.subr.bf16.mxu0 %v717
    %978 = vmatpush1.bf16.msra.mxu0 %v716
    %979 = vmatprep.subr.bf16.mxu0 0
    %980 = vmatpush1.bf16.msra.mxu0 0
    %981 = vmatprep.subr.bf16.mxu0 0
    %982 = vmatpush1.bf16.msra.mxu0 0
    %983 = vmatprep.subr.bf16.mxu0 0
    %984 = vmatpush1.bf16.msra.mxu0 0
    %985 = vmatprep.subr.bf16.mxu0 0
    %986 = vmatpush1.bf16.msra.mxu0 0
    %987 = vmatprep.subr.bf16.mxu0 0
    %988 = vmatpush1.bf16.msra.mxu0 0
    %989 = vmatprep.subr.bf16.mxu0 0
    %990 = vmatpush1.bf16.msra.mxu0 0
    %991 = vmatprep.subr.bf16.mxu0 0
    %992 = vmatpush1.bf16.msra.mxu0 0
    %993 = vmatprep.subr.bf16.mxu0 0
    %994 = vmatpush1.bf16.msra.mxu0 0
    %995 = vmatprep.subr.bf16.mxu0 0
    %996 = vmatpush1.bf16.msra.mxu0 0
    %997 = vmatprep.subr.bf16.mxu0 0
    %998 = vmatpush1.bf16.msra.mxu0 0
    %999 = vmatprep.subr.bf16.mxu0 0
    %1000 = vmatpush1.bf16.msra.mxu0 0
    %1001 = vmatprep.subr.bf16.mxu0 0
    %1002 = vmatpush1.bf16.msra.mxu0 0
    %1003 = vmatprep.mubr.bf16.mxu0 0
    %1004 = vmatmul.mubr.bf16.gmra.mrb[0].mxu0 %v969
    %v1005 = vpop.f32.mrb[0].mxu0
    %v1006 = vadd.f32 0.0, %v1005
    %v1007 = vpop.f32.mrb[0].mxu0
    %v1008 = vadd.f32 0.0, %v1007
    %v1009 = vpop.f32.mrb[0].mxu0
    %v1010 = vpop.f32.mrb[0].mxu0
    %1011 = vdwg.mxu0
    %v1014 = vrot.slane %v1006, 2
    %v1015 = vrot.slane %v1008, 2
    %v1018 = vadd.f32 %v961, %v1014
    %v1019 = vadd.f32 %v962, %v1015
    %v1020 = vxor.u32 %v1018, 2147483648
    %v1021 = vmul.f32 %v1020, 1.442695
    %v1022 = vpow.pop %v1021
    %v1023 = vadd.f32 %v1022, 1.0
    %v1024 = vrcp.pop %v1023
    %v1025 = vmul.f32 1.0, %v1024
    %v1026 = vtanh.pop %v1019
    %v1027 = vxor.u32 %v1019, 2147483648
    %v1028 = vmul.f32 %v1027, 1.442695
    %v1029 = vpow.pop %v1028
    %v1030 = vadd.f32 %v1029, 1.0
    %v1031 = vrcp.pop %v1030
    %v1032 = vmul.f32 1.0, %v1031
    %v1034 = vrot.slane %v958, 6
    %v1036 = vmul.f32 %v1025, %v1034
    %v1037 = vmul.f32 %v1025, %v1026
    %1039 = vrot.lane.b32.xlu0 %v1037, 64
    %v1040 = vpop.permute.xlu0 %1039
    %v1042 = vadd.f32 %v1036, %v1040
    %v1043 = vtanh.pop %v1042
    %v1044 = vmul.f32 %v1032, %v1043
    %v1045 = vld [vmem:[#allocation2 + $0x10] sm:$0x3]
    %v1046 = vld [vmem:[#allocation2 + $0x18] sm:$0x3]
    %v1047 = vpack.c.bf16 %v1044, %v1044
    %v1049 = vrot.slane %v1047, 3
    %1050 = vrot.lane.b32.xlu0 %v1049, 64
    %v1051 = vpop.permute.xlu0 %1050
    %v1053 = vsel %vm477, %v1051, 0
    %1055 = vmatprep.subr.bf16.mxu0 %v711
    %1056 = vmatpush1.bf16.msra.mxu0 %v710
    %1057 = vmatprep.subr.bf16.mxu0 %v713
    %1058 = vmatpush1.bf16.msra.mxu0 %v712
    %1059 = vmatprep.subr.bf16.mxu0 %v715
    %1060 = vmatpush1.bf16.msra.mxu0 %v714
    %1061 = vmatprep.subr.bf16.mxu0 %v717
    %1062 = vmatpush1.bf16.msra.mxu0 %v716
    %1063 = vmatprep.subr.bf16.mxu0 0
    %1064 = vmatpush1.bf16.msra.mxu0 0
    %1065 = vmatprep.subr.bf16.mxu0 0
    %1066 = vmatpush1.bf16.msra.mxu0 0
    %1067 = vmatprep.subr.bf16.mxu0 0
    %1068 = vmatpush1.bf16.msra.mxu0 0
    %1069 = vmatprep.subr.bf16.mxu0 0
    %1070 = vmatpush1.bf16.msra.mxu0 0
    %1071 = vmatprep.subr.bf16.mxu0 0
    %1072 = vmatpush1.bf16.msra.mxu0 0
    %1073 = vmatprep.subr.bf16.mxu0 0
    %1074 = vmatpush1.bf16.msra.mxu0 0
    %1075 = vmatprep.subr.bf16.mxu0 0
    %1076 = vmatpush1.bf16.msra.mxu0 0
    %1077 = vmatprep.subr.bf16.mxu0 0
    %1078 = vmatpush1.bf16.msra.mxu0 0
    %1079 = vmatprep.subr.bf16.mxu0 0
    %1080 = vmatpush1.bf16.msra.mxu0 0
    %1081 = vmatprep.subr.bf16.mxu0 0
    %1082 = vmatpush1.bf16.msra.mxu0 0
    %1083 = vmatprep.subr.bf16.mxu0 0
    %1084 = vmatpush1.bf16.msra.mxu0 0
    %1085 = vmatprep.subr.bf16.mxu0 0
    %1086 = vmatpush1.bf16.msra.mxu0 0
    %1087 = vmatprep.mubr.bf16.mxu0 0
    %1088 = vmatmul.mubr.bf16.gmra.mrb[0].mxu0 %v1053
    %v1089 = vpop.f32.mrb[0].mxu0
    %v1090 = vadd.f32 0.0, %v1089
    %v1091 = vpop.f32.mrb[0].mxu0
    %v1092 = vadd.f32 0.0, %v1091
    %v1093 = vpop.f32.mrb[0].mxu0
    %v1094 = vpop.f32.mrb[0].mxu0
    %1095 = vdwg.mxu0
    %v1096 = vadd.f32 %v1045, %v1090
    %v1097 = vadd.f32 %v1046, %v1092
    %v1098 = vxor.u32 %v1096, 2147483648
    %v1099 = vmul.f32 %v1098, 1.442695
    %v1100 = vpow.pop %v1099
    %v1101 = vadd.f32 %v1100, 1.0
    %v1102 = vrcp.pop %v1101
    %v1103 = vmul.f32 1.0, %v1102
    %v1104 = vtanh.pop %v1097
    %v1105 = vxor.u32 %v1097, 2147483648
    %v1106 = vmul.f32 %v1105, 1.442695
    %v1107 = vpow.pop %v1106
    %v1108 = vadd.f32 %v1107, 1.0
    %v1109 = vrcp.pop %v1108
    %v1110 = vmul.f32 1.0, %v1109
    %v1112 = vrot.slane %v1042, 6
    %v1114 = vmul.f32 %v1103, %v1112
    %v1115 = vmul.f32 %v1103, %v1104
    %1117 = vrot.lane.b32.xlu0 %v1115, 64
    %v1118 = vpop.permute.xlu0 %1117
    %v1120 = vadd.f32 %v1114, %v1118
    %v1121 = vtanh.pop %v1120
    %v1122 = vmul.f32 %v1110, %v1121
    %v1123 = vld [vmem:[#allocation2 + $0x10] sm:$0xc]
    %v1124 = vld [vmem:[#allocation2 + $0x18] sm:$0xc]
    %v1125 = vpack.c.bf16 %v1122, %v1122
    %1127 = vrot.lane.b32.xlu0 %v1125, 64
    %v1128 = vpop.permute.xlu0 %1127
    %v1130 = vsel %vm477, %v1128, 0
    %1132 = vmatprep.subr.bf16.mxu0 %v711
    %1133 = vmatpush1.bf16.msra.mxu0 %v710
    %1134 = vmatprep.subr.bf16.mxu0 %v713
    %1135 = vmatpush1.bf16.msra.mxu0 %v712
    %1136 = vmatprep.subr.bf16.mxu0 %v715
    %1137 = vmatpush1.bf16.msra.mxu0 %v714
    %1138 = vmatprep.subr.bf16.mxu0 %v717
    %1139 = vmatpush1.bf16.msra.mxu0 %v716
    %1140 = vmatprep.subr.bf16.mxu0 0
    %1141 = vmatpush1.bf16.msra.mxu0 0
    %1142 = vmatprep.subr.bf16.mxu0 0
    %1143 = vmatpush1.bf16.msra.mxu0 0
    %1144 = vmatprep.subr.bf16.mxu0 0
    %1145 = vmatpush1.bf16.msra.mxu0 0
    %1146 = vmatprep.subr.bf16.mxu0 0
    %1147 = vmatpush1.bf16.msra.mxu0 0
    %1148 = vmatprep.subr.bf16.mxu0 0
    %1149 = vmatpush1.bf16.msra.mxu0 0
    %1150 = vmatprep.subr.bf16.mxu0 0
    %1151 = vmatpush1.bf16.msra.mxu0 0
    %1152 = vmatprep.subr.bf16.mxu0 0
    %1153 = vmatpush1.bf16.msra.mxu0 0
    %1154 = vmatprep.subr.bf16.mxu0 0
    %1155 = vmatpush1.bf16.msra.mxu0 0
    %1156 = vmatprep.subr.bf16.mxu0 0
    %1157 = vmatpush1.bf16.msra.mxu0 0
    %1158 = vmatprep.subr.bf16.mxu0 0
    %1159 = vmatpush1.bf16.msra.mxu0 0
    %1160 = vmatprep.subr.bf16.mxu0 0
    %1161 = vmatpush1.bf16.msra.mxu0 0
    %1162 = vmatprep.subr.bf16.mxu0 0
    %1163 = vmatpush1.bf16.msra.mxu0 0
    %1164 = vmatprep.mubr.bf16.mxu0 0
    %1165 = vmatmul.mubr.bf16.gmra.mrb[0].mxu0 %v1130
    %v1166 = vpop.f32.mrb[0].mxu0
    %v1167 = vadd.f32 0.0, %v1166
    %v1168 = vpop.f32.mrb[0].mxu0
    %v1169 = vadd.f32 0.0, %v1168
    %v1170 = vpop.f32.mrb[0].mxu0
    %v1171 = vpop.f32.mrb[0].mxu0
    %1172 = vdwg.mxu0
    %v1175 = vrot.slane %v1167, 6
    %v1176 = vrot.slane %v1169, 6
    %v1179 = vadd.f32 %v1123, %v1175
    %v1180 = vadd.f32 %v1124, %v1176
    %v1181 = vxor.u32 %v1179, 2147483648
    %v1182 = vmul.f32 %v1181, 1.442695
    %v1183 = vpow.pop %v1182
    %v1184 = vadd.f32 %v1183, 1.0
    %v1185 = vrcp.pop %v1184
    %v1186 = vmul.f32 1.0, %v1185
    %v1187 = vtanh.pop %v1180
    %v1188 = vxor.u32 %v1180, 2147483648
    %v1189 = vmul.f32 %v1188, 1.442695
    %v1190 = vpow.pop %v1189
    %v1191 = vadd.f32 %v1190, 1.0
    %v1192 = vrcp.pop %v1191
    %v1193 = vmul.f32 1.0, %v1192
    %v1195 = vrot.slane %v1120, 6
    %v1197 = vmul.f32 %v1186, %v1195
    %v1198 = vmul.f32 %v1186, %v1187
    %1200 = vrot.lane.b32.xlu0 %v1198, 64
    %v1201 = vpop.permute.xlu0 %1200
    %v1203 = vadd.f32 %v1197, %v1201
    %v1204 = vtanh.pop %v1203
    %v1205 = vmul.f32 %v1193, %v1204
    %v1206 = vld [vmem:[#allocation2 + $0x10] sm:$0x30]
    %v1207 = vld [vmem:[#allocation2 + $0x18] sm:$0x30]
    %v1208 = vpack.c.bf16 %v1205, %v1205
    %v1210 = vrot.slane %v1208, 1
    %1211 = vrot.lane.b32.xlu0 %v1210, 64
    %v1212 = vpop.permute.xlu0 %1211
    %v1214 = vsel %vm477, %v1212, 0
    %1216 = vmatprep.subr.bf16.mxu0 %v711
    %1217 = vmatpush1.bf16.msra.mxu0 %v710
    %1218 = vmatprep.subr.bf16.mxu0 %v713
    %1219 = vmatpush1.bf16.msra.mxu0 %v712
    %1220 = vmatprep.subr.bf16.mxu0 %v715
    %1221 = vmatpush1.bf16.msra.mxu0 %v714
    %1222 = vmatprep.subr.bf16.mxu0 %v717
    %1223 = vmatpush1.bf16.msra.mxu0 %v716
    %1224 = vmatprep.subr.bf16.mxu0 0
    %1225 = vmatpush1.bf16.msra.mxu0 0
    %1226 = vmatprep.subr.bf16.mxu0 0
    %1227 = vmatpush1.bf16.msra.mxu0 0
    %1228 = vmatprep.subr.bf16.mxu0 0
    %1229 = vmatpush1.bf16.msra.mxu0 0
    %1230 = vmatprep.subr.bf16.mxu0 0
    %1231 = vmatpush1.bf16.msra.mxu0 0
    %1232 = vmatprep.subr.bf16.mxu0 0
    %1233 = vmatpush1.bf16.msra.mxu0 0
    %1234 = vmatprep.subr.bf16.mxu0 0
    %1235 = vmatpush1.bf16.msra.mxu0 0
    %1236 = vmatprep.subr.bf16.mxu0 0
    %1237 = vmatpush1.bf16.msra.mxu0 0
    %1238 = vmatprep.subr.bf16.mxu0 0
    %1239 = vmatpush1.bf16.msra.mxu0 0
    %1240 = vmatprep.subr.bf16.mxu0 0
    %1241 = vmatpush1.bf16.msra.mxu0 0
    %1242 = vmatprep.subr.bf16.mxu0 0
    %1243 = vmatpush1.bf16.msra.mxu0 0
    %1244 = vmatprep.subr.bf16.mxu0 0
    %1245 = vmatpush1.bf16.msra.mxu0 0
    %1246 = vmatprep.subr.bf16.mxu0 0
    %1247 = vmatpush1.bf16.msra.mxu0 0
    %1248 = vmatprep.mubr.bf16.mxu0 0
    %1249 = vmatmul.mubr.bf16.gmra.mrb[0].mxu0 %v1214
    %v1250 = vpop.f32.mrb[0].mxu0
    %v1251 = vadd.f32 0.0, %v1250
    %v1252 = vpop.f32.mrb[0].mxu0
    %v1253 = vadd.f32 0.0, %v1252
    %v1254 = vpop.f32.mrb[0].mxu0
    %v1255 = vpop.f32.mrb[0].mxu0
    %1256 = vdwg.mxu0
    %v1259 = vrot.slane %v1251, 4
    %v1260 = vrot.slane %v1253, 4
    %v1263 = vadd.f32 %v1206, %v1259
    %v1264 = vadd.f32 %v1207, %v1260
    %v1265 = vxor.u32 %v1263, 2147483648
    %v1266 = vmul.f32 %v1265, 1.442695
    %v1267 = vpow.pop %v1266
    %v1268 = vadd.f32 %v1267, 1.0
    %v1269 = vrcp.pop %v1268
    %v1270 = vmul.f32 1.0, %v1269
    %v1271 = vtanh.pop %v1264
    %v1272 = vxor.u32 %v1264, 2147483648
    %v1273 = vmul.f32 %v1272, 1.442695
    %v1274 = vpow.pop %v1273
    %v1275 = vadd.f32 %v1274, 1.0
    %v1276 = vrcp.pop %v1275
    %v1277 = vmul.f32 1.0, %v1276
    %v1279 = vrot.slane %v1203, 6
    %v1281 = vmul.f32 %v1270, %v1279
    %v1282 = vmul.f32 %v1270, %v1271
    %1284 = vrot.lane.b32.xlu0 %v1282, 64
    %v1285 = vpop.permute.xlu0 %1284
    %v1287 = vadd.f32 %v1281, %v1285
    %v1288 = vtanh.pop %v1287
    %v1289 = vmul.f32 %v1277, %v1288
    %v1290 = vld [vmem:[#allocation2 + $0x10] sm:$0xc0]
    %v1291 = vld [vmem:[#allocation2 + $0x18] sm:$0xc0]
    %v1292 = vpack.c.bf16 %v1289, %v1289
    %v1294 = vrot.slane %v1292, 2
    %1295 = vrot.lane.b32.xlu0 %v1294, 64
    %v1296 = vpop.permute.xlu0 %1295
    %v1298 = vsel %vm477, %v1296, 0
    %1300 = vmatprep.subr.bf16.mxu0 %v711
    %1301 = vmatpush1.bf16.msra.mxu0 %v710
    %1302 = vmatprep.subr.bf16.mxu0 %v713
    %1303 = vmatpush1.bf16.msra.mxu0 %v712
    %1304 = vmatprep.subr.bf16.mxu0 %v715
    %1305 = vmatpush1.bf16.msra.mxu0 %v714
    %1306 = vmatprep.subr.bf16.mxu0 %v717
    %1307 = vmatpush1.bf16.msra.mxu0 %v716
    %1308 = vmatprep.subr.bf16.mxu0 0
    %1309 = vmatpush1.bf16.msra.mxu0 0
    %1310 = vmatprep.subr.bf16.mxu0 0
    %1311 = vmatpush1.bf16.msra.mxu0 0
    %1312 = vmatprep.subr.bf16.mxu0 0
    %1313 = vmatpush1.bf16.msra.mxu0 0
    %1314 = vmatprep.subr.bf16.mxu0 0
    %1315 = vmatpush1.bf16.msra.mxu0 0
    %1316 = vmatprep.subr.bf16.mxu0 0
    %1317 = vmatpush1.bf16.msra.mxu0 0
    %1318 = vmatprep.subr.bf16.mxu0 0
    %1319 = vmatpush1.bf16.msra.mxu0 0
    %1320 = vmatprep.subr.bf16.mxu0 0
    %1321 = vmatpush1.bf16.msra.mxu0 0
    %1322 = vmatprep.subr.bf16.mxu0 0
    %1323 = vmatpush1.bf16.msra.mxu0 0
    %1324 = vmatprep.subr.bf16.mxu0 0
    %1325 = vmatpush1.bf16.msra.mxu0 0
    %1326 = vmatprep.subr.bf16.mxu0 0
    %1327 = vmatpush1.bf16.msra.mxu0 0
    %1328 = vmatprep.subr.bf16.mxu0 0
    %1329 = vmatpush1.bf16.msra.mxu0 0
    %1330 = vmatprep.subr.bf16.mxu0 0
    %1331 = vmatpush1.bf16.msra.mxu0 0
    %1332 = vmatprep.mubr.bf16.mxu0 0
    %1333 = vmatmul.mubr.bf16.gmra.mrb[0].mxu0 %v1298
    %v1334 = vpop.f32.mrb[0].mxu0
    %v1335 = vadd.f32 0.0, %v1334
    %v1336 = vpop.f32.mrb[0].mxu0
    %v1337 = vadd.f32 0.0, %v1336
    %v1338 = vpop.f32.mrb[0].mxu0
    %v1339 = vpop.f32.mrb[0].mxu0
    %1340 = vdwg.mxu0
    %v1343 = vrot.slane %v1335, 2
    %v1344 = vrot.slane %v1337, 2
    %v1347 = vadd.f32 %v1290, %v1343
    %v1348 = vadd.f32 %v1291, %v1344
    %v1349 = vxor.u32 %v1347, 2147483648
    %v1350 = vmul.f32 %v1349, 1.442695
    %v1351 = vpow.pop %v1350
    %v1352 = vadd.f32 %v1351, 1.0
    %v1353 = vrcp.pop %v1352
    %v1354 = vmul.f32 1.0, %v1353
    %v1355 = vtanh.pop %v1348
    %v1356 = vxor.u32 %v1348, 2147483648
    %v1357 = vmul.f32 %v1356, 1.442695
    %v1358 = vpow.pop %v1357
    %v1359 = vadd.f32 %v1358, 1.0
    %v1360 = vrcp.pop %v1359
    %v1361 = vmul.f32 1.0, %v1360
    %v1363 = vrot.slane %v1287, 6
    %v1365 = vmul.f32 %v1354, %v1363
    %v1366 = vmul.f32 %v1354, %v1355
    %1368 = vrot.lane.b32.xlu0 %v1366, 64
    %v1369 = vpop.permute.xlu0 %1368
    %v1371 = vadd.f32 %v1365, %v1369
    %v1372 = vtanh.pop %v1371
    %v1373 = vmul.f32 %v1361, %v1372
    %v1374 = vpack.c.bf16 %v516, %v516
    %v1375 = vld [vmem:[%s9] sm:$0xff]
    %v1376 = vld [vmem:[%s9 + $0x8] sm:$0xff]
    %v1377 = vld [vmem:[%s9 + $0x10] sm:$0xff]
    %v1378 = vld [vmem:[%s9 + $0x18] sm:$0xff]
    %v1379 = vld [vmem:[%s9 + $0x20] sm:$0xff]
    %v1380 = vld [vmem:[%s9 + $0x28] sm:$0xff]
    %v1381 = vld [vmem:[%s9 + $0x30] sm:$0xff]
    %v1382 = vld [vmem:[%s9 + $0x38] sm:$0xff]
    %v1383 = vpack.c.bf16 %v1373, %v1373
    %v1384 = vld [vmem:[%s10] sm:$0xff]
    %v1385 = vld [vmem:[%s10 + $0x8] sm:$0xff]
    %v1386 = vld [vmem:[%s10 + $0x10] sm:$0xff]
    %v1387 = vld [vmem:[%s10 + $0x18] sm:$0xff]
    %v1388 = vld [vmem:[%s10 + $0x20] sm:$0xff]
    %v1389 = vld [vmem:[%s10 + $0x28] sm:$0xff]
    %v1390 = vld [vmem:[%s10 + $0x30] sm:$0xff]
    %v1391 = vld [vmem:[%s10 + $0x38] sm:$0xff]
    %v1393 = vrot.slane %v1383, 3
    %1394 = vrot.lane.b32.xlu0 %v1393, 64
    %v1395 = vpop.permute.xlu0 %1394
    %v1404 = vunpack.c.l.b16 %v1384
    %v1405 = vunpack.c.h.b16 %v1384
    %v1406 = vunpack.c.l.b16 %v1385
    %v1407 = vunpack.c.h.b16 %v1385
    %v1408 = vunpack.c.l.b16 %v1386
    %v1409 = vunpack.c.h.b16 %v1386
    %v1410 = vunpack.c.l.b16 %v1387
    %v1411 = vunpack.c.h.b16 %v1387
    %v1412 = vunpack.c.l.b16 %v1388
    %v1413 = vunpack.c.h.b16 %v1388
    %v1414 = vunpack.c.l.b16 %v1389
    %v1415 = vunpack.c.h.b16 %v1389
    %v1416 = vunpack.c.l.b16 %v1390
    %v1417 = vunpack.c.h.b16 %v1390
    %v1418 = vunpack.c.l.b16 %v1391
    %v1419 = vunpack.c.h.b16 %v1391
    %v1420 = vpack.c.b16 %v1406, %v1404
    %v1421 = vpack.c.b16 %v1407, %v1405
    %v1422 = vpack.c.b16 %v1410, %v1408
    %v1423 = vpack.c.b16 %v1411, %v1409
    %v1424 = vpack.c.b16 %v1414, %v1412
    %v1425 = vpack.c.b16 %v1415, %v1413
    %v1426 = vpack.c.b16 %v1418, %v1416
    %v1427 = vpack.c.b16 %v1419, %v1417
    %v1437 = vsel %vm477, %v1395, 0
    %1439 = vmatprep.subr.bf16.mxu0 %v1421
    %1440 = vmatpush1.bf16.msra.mxu0 %v1420
    %1441 = vmatprep.subr.bf16.mxu0 %v1423
    %1442 = vmatpush1.bf16.msra.mxu0 %v1422
    %1443 = vmatprep.subr.bf16.mxu0 %v1425
    %1444 = vmatpush1.bf16.msra.mxu0 %v1424
    %1445 = vmatprep.subr.bf16.mxu0 %v1427
    %1446 = vmatpush1.bf16.msra.mxu0 %v1426
    %1447 = vmatprep.subr.bf16.mxu0 0
    %1448 = vmatpush1.bf16.msra.mxu0 0
    %1449 = vmatprep.subr.bf16.mxu0 0
    %1450 = vmatpush1.bf16.msra.mxu0 0
    %1451 = vmatprep.subr.bf16.mxu0 0
    %1452 = vmatpush1.bf16.msra.mxu0 0
    %1453 = vmatprep.subr.bf16.mxu0 0
    %1454 = vmatpush1.bf16.msra.mxu0 0
    %1455 = vmatprep.subr.bf16.mxu0 0
    %1456 = vmatpush1.bf16.msra.mxu0 0
    %1457 = vmatprep.subr.bf16.mxu0 0
    %1458 = vmatpush1.bf16.msra.mxu0 0
    %1459 = vmatprep.subr.bf16.mxu0 0
    %1460 = vmatpush1.bf16.msra.mxu0 0
    %1461 = vmatprep.subr.bf16.mxu0 0
    %1462 = vmatpush1.bf16.msra.mxu0 0
    %1463 = vmatprep.subr.bf16.mxu0 0
    %1464 = vmatpush1.bf16.msra.mxu0 0
    %1465 = vmatprep.subr.bf16.mxu0 0
    %1466 = vmatpush1.bf16.msra.mxu0 0
    %1467 = vmatprep.subr.bf16.mxu0 0
    %1468 = vmatpush1.bf16.msra.mxu0 0
    %1469 = vmatprep.subr.bf16.mxu0 0
    %1470 = vmatpush1.bf16.msra.mxu0 0
    %1471 = vmatprep.mubr.bf16.mxu0 0
    %1472 = vmatmul.mubr.bf16.gmra.mrb[0].mxu0 %v1437
    %v1473 = vpop.f32.mrb[0].mxu0
    %v1474 = vadd.f32 0.0, %v1473
    %v1475 = vpop.f32.mrb[0].mxu0
    %v1476 = vadd.f32 0.0, %v1475
    %v1477 = vpop.f32.mrb[0].mxu0
    %v1478 = vpop.f32.mrb[0].mxu0
    %1479 = vdwg.mxu0
    %v1488 = vunpack.c.l.b16 %v1375
    %v1489 = vunpack.c.h.b16 %v1375
    %v1490 = vunpack.c.l.b16 %v1376
    %v1491 = vunpack.c.h.b16 %v1376
    %v1492 = vunpack.c.l.b16 %v1377
    %v1493 = vunpack.c.h.b16 %v1377
    %v1494 = vunpack.c.l.b16 %v1378
    %v1495 = vunpack.c.h.b16 %v1378
    %v1496 = vunpack.c.l.b16 %v1379
    %v1497 = vunpack.c.h.b16 %v1379
    %v1498 = vunpack.c.l.b16 %v1380
    %v1499 = vunpack.c.h.b16 %v1380
    %v1500 = vunpack.c.l.b16 %v1381
    %v1501 = vunpack.c.h.b16 %v1381
    %v1502 = vunpack.c.l.b16 %v1382
    %v1503 = vunpack.c.h.b16 %v1382
    %v1504 = vpack.c.b16 %v1490, %v1488
    %v1505 = vpack.c.b16 %v1491, %v1489
    %v1506 = vpack.c.b16 %v1494, %v1492
    %v1507 = vpack.c.b16 %v1495, %v1493
    %v1508 = vpack.c.b16 %v1498, %v1496
    %v1509 = vpack.c.b16 %v1499, %v1497
    %v1510 = vpack.c.b16 %v1502, %v1500
    %v1511 = vpack.c.b16 %v1503, %v1501
    %v1521 = vsel %vm477, %v1374, 0
    %1523 = vmatprep.subr.bf16.mxu0 %v1505
    %1524 = vmatpush1.bf16.msra.mxu0 %v1504
    %1525 = vmatprep.subr.bf16.mxu0 %v1507
    %1526 = vmatpush1.bf16.msra.mxu0 %v1506
    %1527 = vmatprep.subr.bf16.mxu0 %v1509
    %1528 = vmatpush1.bf16.msra.mxu0 %v1508
    %1529 = vmatprep.subr.bf16.mxu0 %v1511
    %1530 = vmatpush1.bf16.msra.mxu0 %v1510
    %1531 = vmatprep.subr.bf16.mxu0 0
    %1532 = vmatpush1.bf16.msra.mxu0 0
    %1533 = vmatprep.subr.bf16.mxu0 0
    %1534 = vmatpush1.bf16.msra.mxu0 0
    %1535 = vmatprep.subr.bf16.mxu0 0
    %1536 = vmatpush1.bf16.msra.mxu0 0
    %1537 = vmatprep.subr.bf16.mxu0 0
    %1538 = vmatpush1.bf16.msra.mxu0 0
    %1539 = vmatprep.subr.bf16.mxu0 0
    %1540 = vmatpush1.bf16.msra.mxu0 0
    %1541 = vmatprep.subr.bf16.mxu0 0
    %1542 = vmatpush1.bf16.msra.mxu0 0
    %1543 = vmatprep.subr.bf16.mxu0 0
    %1544 = vmatpush1.bf16.msra.mxu0 0
    %1545 = vmatprep.subr.bf16.mxu0 0
    %1546 = vmatpush1.bf16.msra.mxu0 0
    %1547 = vmatprep.subr.bf16.mxu0 0
    %1548 = vmatpush1.bf16.msra.mxu0 0
    %1549 = vmatprep.subr.bf16.mxu0 0
    %1550 = vmatpush1.bf16.msra.mxu0 0
    %1551 = vmatprep.subr.bf16.mxu0 0
    %1552 = vmatpush1.bf16.msra.mxu0 0
    %1553 = vmatprep.subr.bf16.mxu0 0
    %1554 = vmatpush1.bf16.msra.mxu0 0
    %1555 = vmatprep.mubr.bf16.mxu0 0
    %1556 = vmatmul.mubr.bf16.gmra.mrb[0].mxu0 %v1521
    %v1557 = vpop.f32.mrb[0].mxu0
    %v1558 = vadd.f32 %v1474, %v1557
    %v1559 = vpop.f32.mrb[0].mxu0
    %v1560 = vadd.f32 %v1476, %v1559
    %v1561 = vpop.f32.mrb[0].mxu0
    %v1562 = vpop.f32.mrb[0].mxu0
    %1563 = vdwg.mxu0
    %v1564 = vld [vmem:[%s11] sm:$0x3]
    %v1566 = vlaneseq
    %v1567 = vshrl.u32 %v1566, 7
    %v1568 = vsub.s32 0, %v1567
    %v1569 = vrot.slane %v1564, %v1568
    %v1570 = vlaneseq
    %v1571 = vshrl.u32 %v1570, 7
    %v1572 = vsub.s32 1, %v1571
    %v1573 = vrot.slane %v1564, %v1572
    %v1576 = vadd.f32 %v1558, %v1569
    %v1577 = vadd.f32 %v1560, %v1573
    %v1578 = vmax.f32 %v1576, 0.0
    %v1579 = vmax.f32 %v1577, 0.0
    %v1580 = vpack.c.bf16 %v1578, %v1578
    %v1581 = vpack.c.bf16 %v1579, %v1579
    %v1582 = vld [vmem:[#allocation3] sm:$0xff]
    %v1583 = vld [vmem:[#allocation3 + $0x8] sm:$0xff]
    %v1584 = vld [vmem:[#allocation3 + $0x10] sm:$0xff]
    %v1585 = vld [vmem:[#allocation3 + $0x18] sm:$0xff]
    %v1586 = vld [vmem:[#allocation3 + $0x20] sm:$0xff]
    %v1587 = vld [vmem:[#allocation3 + $0x28] sm:$0xff]
    %v1588 = vld [vmem:[#allocation3 + $0x30] sm:$0xff]
    %v1589 = vld [vmem:[#allocation3 + $0x38] sm:$0xff]
    %v1590 = vld [vmem:[#allocation3 + $0x40] sm:$0xff]
    %v1591 = vld [vmem:[#allocation3 + $0x48] sm:$0xff]
    %v1592 = vld [vmem:[#allocation3 + $0x50] sm:$0xff]
    %v1593 = vld [vmem:[#allocation3 + $0x58] sm:$0xff]
    %v1594 = vld [vmem:[#allocation3 + $0x60] sm:$0xff]
    %v1595 = vld [vmem:[#allocation3 + $0x68] sm:$0xff]
    %v1596 = vld [vmem:[#allocation3 + $0x70] sm:$0xff]
    %v1597 = vld [vmem:[#allocation3 + $0x78] sm:$0xff]
    %v1598 = vld [vmem:[#allocation3 + $0x80] sm:$0xff]
    %v1599 = vld [vmem:[#allocation3 + $0x88] sm:$0xff]
    %v1600 = vld [vmem:[#allocation3 + $0x90] sm:$0xff]
    %v1601 = vld [vmem:[#allocation3 + $0x98] sm:$0xff]
    %v1602 = vld [vmem:[#allocation3 + $0xa0] sm:$0xff]
    %v1603 = vld [vmem:[#allocation3 + $0xa8] sm:$0xff]
    %v1604 = vld [vmem:[#allocation3 + $0xb0] sm:$0xff]
    %v1605 = vld [vmem:[#allocation3 + $0xb8] sm:$0xff]
    %v1606 = vld [vmem:[#allocation3 + $0xc0] sm:$0xff]
    %v1607 = vld [vmem:[#allocation3 + $0xc8] sm:$0xff]
    %v1608 = vld [vmem:[#allocation3 + $0xd0] sm:$0xff]
    %v1609 = vld [vmem:[#allocation3 + $0xd8] sm:$0xff]
    %v1610 = vld [vmem:[#allocation3 + $0xe0] sm:$0xff]
    %v1611 = vld [vmem:[#allocation3 + $0xe8] sm:$0xff]
    %v1612 = vld [vmem:[#allocation3 + $0xf0] sm:$0xff]
    %v1613 = vld [vmem:[#allocation3 + $0xf8] sm:$0xff]
    %v1614 = vld [vmem:[#allocation3 + $0x100] sm:$0xff]
    %v1615 = vld [vmem:[#allocation3 + $0x108] sm:$0xff]
    %v1616 = vld [vmem:[#allocation3 + $0x110] sm:$0xff]
    %v1617 = vld [vmem:[#allocation3 + $0x118] sm:$0xff]
    %v1618 = vld [vmem:[#allocation3 + $0x120] sm:$0xff]
    %v1619 = vld [vmem:[#allocation3 + $0x128] sm:$0xff]
    %v1620 = vld [vmem:[#allocation3 + $0x130] sm:$0xff]
    %v1621 = vld [vmem:[#allocation3 + $0x138] sm:$0xff]
    %v1622 = vld [vmem:[#allocation3 + $0x140] sm:$0xff]
    %v1623 = vld [vmem:[#allocation3 + $0x148] sm:$0xff]
    %v1624 = vld [vmem:[#allocation3 + $0x150] sm:$0xff]
    %v1625 = vld [vmem:[#allocation3 + $0x158] sm:$0xff]
    %v1626 = vld [vmem:[#allocation3 + $0x160] sm:$0xff]
    %v1627 = vld [vmem:[#allocation3 + $0x168] sm:$0xff]
    %v1628 = vld [vmem:[#allocation3 + $0x170] sm:$0xff]
    %v1629 = vld [vmem:[#allocation3 + $0x178] sm:$0xff]
    %v1630 = vld [vmem:[#allocation3 + $0x180] sm:$0xff]
    %v1631 = vld [vmem:[#allocation3 + $0x188] sm:$0xff]
    %v1632 = vld [vmem:[#allocation3 + $0x190] sm:$0xff]
    %v1633 = vld [vmem:[#allocation3 + $0x198] sm:$0xff]
    %v1634 = vld [vmem:[#allocation3 + $0x1a0] sm:$0xff]
    %v1635 = vld [vmem:[#allocation3 + $0x1a8] sm:$0xff]
    %v1636 = vld [vmem:[#allocation3 + $0x1b0] sm:$0xff]
    %v1637 = vld [vmem:[#allocation3 + $0x1b8] sm:$0xff]
    %v1638 = vld [vmem:[#allocation3 + $0x1c0] sm:$0xff]
    %v1639 = vld [vmem:[#allocation3 + $0x1c8] sm:$0xff]
    %v1640 = vld [vmem:[#allocation3 + $0x1d0] sm:$0xff]
    %v1641 = vld [vmem:[#allocation3 + $0x1d8] sm:$0xff]
    %v1642 = vld [vmem:[#allocation3 + $0x1e0] sm:$0xff]
    %v1643 = vld [vmem:[#allocation3 + $0x1e8] sm:$0xff]
    %v1644 = vld [vmem:[#allocation3 + $0x1f0] sm:$0xff]
    %v1645 = vld [vmem:[#allocation3 + $0x1f8] sm:$0xff]
    %v1646 = vld [vmem:[%s13] sm:$0xf]
    %v1648 = vlaneseq
    %v1649 = vshrl.u32 %v1648, 7
    %v1650 = vsub.s32 0, %v1649
    %v1651 = vrot.slane %v1646, %v1650
    %v1652 = vlaneseq
    %v1653 = vshrl.u32 %v1652, 7
    %v1654 = vsub.s32 1, %v1653
    %v1655 = vrot.slane %v1646, %v1654
    %v1656 = vlaneseq
    %v1657 = vshrl.u32 %v1656, 7
    %v1658 = vsub.s32 2, %v1657
    %v1659 = vrot.slane %v1646, %v1658
    %v1660 = vlaneseq
    %v1661 = vshrl.u32 %v1660, 7
    %v1662 = vsub.s32 3, %v1661
    %v1663 = vrot.slane %v1646, %v1662
    %v1732 = vunpack.c.l.b16 %v1582
    %v1733 = vunpack.c.h.b16 %v1582
    %v1734 = vunpack.c.l.b16 %v1583
    %v1735 = vunpack.c.h.b16 %v1583
    %v1736 = vunpack.c.l.b16 %v1584
    %v1737 = vunpack.c.h.b16 %v1584
    %v1738 = vunpack.c.l.b16 %v1585
    %v1739 = vunpack.c.h.b16 %v1585
    %v1740 = vunpack.c.l.b16 %v1586
    %v1741 = vunpack.c.h.b16 %v1586
    %v1742 = vunpack.c.l.b16 %v1587
    %v1743 = vunpack.c.h.b16 %v1587
    %v1744 = vunpack.c.l.b16 %v1588
    %v1745 = vunpack.c.h.b16 %v1588
    %v1746 = vunpack.c.l.b16 %v1589
    %v1747 = vunpack.c.h.b16 %v1589
    %v1748 = vunpack.c.l.b16 %v1590
    %v1749 = vunpack.c.h.b16 %v1590
    %v1750 = vunpack.c.l.b16 %v1591
    %v1751 = vunpack.c.h.b16 %v1591
    %v1752 = vunpack.c.l.b16 %v1592
    %v1753 = vunpack.c.h.b16 %v1592
    %v1754 = vunpack.c.l.b16 %v1593
    %v1755 = vunpack.c.h.b16 %v1593
    %v1756 = vunpack.c.l.b16 %v1594
    %v1757 = vunpack.c.h.b16 %v1594
    %v1758 = vunpack.c.l.b16 %v1595
    %v1759 = vunpack.c.h.b16 %v1595
    %v1760 = vunpack.c.l.b16 %v1596
    %v1761 = vunpack.c.h.b16 %v1596
    %v1762 = vunpack.c.l.b16 %v1597
    %v1763 = vunpack.c.h.b16 %v1597
    %v1764 = vunpack.c.l.b16 %v1598
    %v1765 = vunpack.c.h.b16 %v1598
    %v1766 = vunpack.c.l.b16 %v1599
    %v1767 = vunpack.c.h.b16 %v1599
    %v1768 = vunpack.c.l.b16 %v1600
    %v1769 = vunpack.c.h.b16 %v1600
    %v1770 = vunpack.c.l.b16 %v1601
    %v1771 = vunpack.c.h.b16 %v1601
    %v1772 = vunpack.c.l.b16 %v1602
    %v1773 = vunpack.c.h.b16 %v1602
    %v1774 = vunpack.c.l.b16 %v1603
    %v1775 = vunpack.c.h.b16 %v1603
    %v1776 = vunpack.c.l.b16 %v1604
    %v1777 = vunpack.c.h.b16 %v1604
    %v1778 = vunpack.c.l.b16 %v1605
    %v1779 = vunpack.c.h.b16 %v1605
    %v1780 = vunpack.c.l.b16 %v1606
    %v1781 = vunpack.c.h.b16 %v1606
    %v1782 = vunpack.c.l.b16 %v1607
    %v1783 = vunpack.c.h.b16 %v1607
    %v1784 = vunpack.c.l.b16 %v1608
    %v1785 = vunpack.c.h.b16 %v1608
    %v1786 = vunpack.c.l.b16 %v1609
    %v1787 = vunpack.c.h.b16 %v1609
    %v1788 = vunpack.c.l.b16 %v1610
    %v1789 = vunpack.c.h.b16 %v1610
    %v1790 = vunpack.c.l.b16 %v1611
    %v1791 = vunpack.c.h.b16 %v1611
    %v1792 = vunpack.c.l.b16 %v1612
    %v1793 = vunpack.c.h.b16 %v1612
    %v1794 = vunpack.c.l.b16 %v1613
    %v1795 = vunpack.c.h.b16 %v1613
    %v1796 = vunpack.c.l.b16 %v1614
    %v1797 = vunpack.c.h.b16 %v1614
    %v1798 = vunpack.c.l.b16 %v1615
    %v1799 = vunpack.c.h.b16 %v1615
    %v1800 = vunpack.c.l.b16 %v1616
    %v1801 = vunpack.c.h.b16 %v1616
    %v1802 = vunpack.c.l.b16 %v1617
    %v1803 = vunpack.c.h.b16 %v1617
    %v1804 = vunpack.c.l.b16 %v1618
    %v1805 = vunpack.c.h.b16 %v1618
    %v1806 = vunpack.c.l.b16 %v1619
    %v1807 = vunpack.c.h.b16 %v1619
    %v1808 = vunpack.c.l.b16 %v1620
    %v1809 = vunpack.c.h.b16 %v1620
    %v1810 = vunpack.c.l.b16 %v1621
    %v1811 = vunpack.c.h.b16 %v1621
    %v1812 = vunpack.c.l.b16 %v1622
    %v1813 = vunpack.c.h.b16 %v1622
    %v1814 = vunpack.c.l.b16 %v1623
    %v1815 = vunpack.c.h.b16 %v1623
    %v1816 = vunpack.c.l.b16 %v1624
    %v1817 = vunpack.c.h.b16 %v1624
    %v1818 = vunpack.c.l.b16 %v1625
    %v1819 = vunpack.c.h.b16 %v1625
    %v1820 = vunpack.c.l.b16 %v1626
    %v1821 = vunpack.c.h.b16 %v1626
    %v1822 = vunpack.c.l.b16 %v1627
    %v1823 = vunpack.c.h.b16 %v1627
    %v1824 = vunpack.c.l.b16 %v1628
    %v1825 = vunpack.c.h.b16 %v1628
    %v1826 = vunpack.c.l.b16 %v1629
    %v1827 = vunpack.c.h.b16 %v1629
    %v1828 = vunpack.c.l.b16 %v1630
    %v1829 = vunpack.c.h.b16 %v1630
    %v1830 = vunpack.c.l.b16 %v1631
    %v1831 = vunpack.c.h.b16 %v1631
    %v1832 = vunpack.c.l.b16 %v1632
    %v1833 = vunpack.c.h.b16 %v1632
    %v1834 = vunpack.c.l.b16 %v1633
    %v1835 = vunpack.c.h.b16 %v1633
    %v1836 = vunpack.c.l.b16 %v1634
    %v1837 = vunpack.c.h.b16 %v1634
    %v1838 = vunpack.c.l.b16 %v1635
    %v1839 = vunpack.c.h.b16 %v1635
    %v1840 = vunpack.c.l.b16 %v1636
    %v1841 = vunpack.c.h.b16 %v1636
    %v1842 = vunpack.c.l.b16 %v1637
    %v1843 = vunpack.c.h.b16 %v1637
    %v1844 = vunpack.c.l.b16 %v1638
    %v1845 = vunpack.c.h.b16 %v1638
    %v1846 = vunpack.c.l.b16 %v1639
    %v1847 = vunpack.c.h.b16 %v1639
    %v1848 = vunpack.c.l.b16 %v1640
    %v1849 = vunpack.c.h.b16 %v1640
    %v1850 = vunpack.c.l.b16 %v1641
    %v1851 = vunpack.c.h.b16 %v1641
    %v1852 = vunpack.c.l.b16 %v1642
    %v1853 = vunpack.c.h.b16 %v1642
    %v1854 = vunpack.c.l.b16 %v1643
    %v1855 = vunpack.c.h.b16 %v1643
    %v1856 = vunpack.c.l.b16 %v1644
    %v1857 = vunpack.c.h.b16 %v1644
    %v1858 = vunpack.c.l.b16 %v1645
    %v1859 = vunpack.c.h.b16 %v1645
    %v1860 = vpack.c.b16 %v1736, %v1732
    %v1861 = vpack.c.b16 %v1737, %v1733
    %v1862 = vpack.c.b16 %v1738, %v1734
    %v1863 = vpack.c.b16 %v1739, %v1735
    %v1864 = vpack.c.b16 %v1744, %v1740
    %v1865 = vpack.c.b16 %v1745, %v1741
    %v1866 = vpack.c.b16 %v1746, %v1742
    %v1867 = vpack.c.b16 %v1747, %v1743
    %v1868 = vpack.c.b16 %v1752, %v1748
    %v1869 = vpack.c.b16 %v1753, %v1749
    %v1870 = vpack.c.b16 %v1754, %v1750
    %v1871 = vpack.c.b16 %v1755, %v1751
    %v1872 = vpack.c.b16 %v1760, %v1756
    %v1873 = vpack.c.b16 %v1761, %v1757
    %v1874 = vpack.c.b16 %v1762, %v1758
    %v1875 = vpack.c.b16 %v1763, %v1759
    %v1876 = vpack.c.b16 %v1768, %v1764
    %v1877 = vpack.c.b16 %v1769, %v1765
    %v1878 = vpack.c.b16 %v1770, %v1766
    %v1879 = vpack.c.b16 %v1771, %v1767
    %v1880 = vpack.c.b16 %v1776, %v1772
    %v1881 = vpack.c.b16 %v1777, %v1773
    %v1882 = vpack.c.b16 %v1778, %v1774
    %v1883 = vpack.c.b16 %v1779, %v1775
    %v1884 = vpack.c.b16 %v1784, %v1780
    %v1885 = vpack.c.b16 %v1785, %v1781
    %v1886 = vpack.c.b16 %v1786, %v1782
    %v1887 = vpack.c.b16 %v1787, %v1783
    %v1888 = vpack.c.b16 %v1792, %v1788
    %v1889 = vpack.c.b16 %v1793, %v1789
    %v1890 = vpack.c.b16 %v1794, %v1790
    %v1891 = vpack.c.b16 %v1795, %v1791
    %v1892 = vpack.c.b16 %v1800, %v1796
    %v1893 = vpack.c.b16 %v1801, %v1797
    %v1894 = vpack.c.b16 %v1802, %v1798
    %v1895 = vpack.c.b16 %v1803, %v1799
    %v1896 = vpack.c.b16 %v1808, %v1804
    %v1897 = vpack.c.b16 %v1809, %v1805
    %v1898 = vpack.c.b16 %v1810, %v1806
    %v1899 = vpack.c.b16 %v1811, %v1807
    %v1900 = vpack.c.b16 %v1816, %v1812
    %v1901 = vpack.c.b16 %v1817, %v1813
    %v1902 = vpack.c.b16 %v1818, %v1814
    %v1903 = vpack.c.b16 %v1819, %v1815
    %v1904 = vpack.c.b16 %v1824, %v1820
    %v1905 = vpack.c.b16 %v1825, %v1821
    %v1906 = vpack.c.b16 %v1826, %v1822
    %v1907 = vpack.c.b16 %v1827, %v1823
    %v1908 = vpack.c.b16 %v1832, %v1828
    %v1909 = vpack.c.b16 %v1833, %v1829
    %v1910 = vpack.c.b16 %v1834, %v1830
    %v1911 = vpack.c.b16 %v1835, %v1831
    %v1912 = vpack.c.b16 %v1840, %v1836
    %v1913 = vpack.c.b16 %v1841, %v1837
    %v1914 = vpack.c.b16 %v1842, %v1838
    %v1915 = vpack.c.b16 %v1843, %v1839
    %v1916 = vpack.c.b16 %v1848, %v1844
    %v1917 = vpack.c.b16 %v1849, %v1845
    %v1918 = vpack.c.b16 %v1850, %v1846
    %v1919 = vpack.c.b16 %v1851, %v1847
    %v1920 = vpack.c.b16 %v1856, %v1852
    %v1921 = vpack.c.b16 %v1857, %v1853
    %v1922 = vpack.c.b16 %v1858, %v1854
    %v1923 = vpack.c.b16 %v1859, %v1855
    %1988 = vmatprep.subr.bf16.mxu0 %v1861
    %1989 = vmatpush1.bf16.msra.mxu0 %v1860
    %1990 = vmatprep.subr.bf16.mxu0 %v1865
    %1991 = vmatpush1.bf16.msra.mxu0 %v1864
    %1992 = vmatprep.subr.bf16.mxu0 %v1869
    %1993 = vmatpush1.bf16.msra.mxu0 %v1868
    %1994 = vmatprep.subr.bf16.mxu0 %v1873
    %1995 = vmatpush1.bf16.msra.mxu0 %v1872
    %1996 = vmatprep.subr.bf16.mxu0 %v1877
    %1997 = vmatpush1.bf16.msra.mxu0 %v1876
    %1998 = vmatprep.subr.bf16.mxu0 %v1881
    %1999 = vmatpush1.bf16.msra.mxu0 %v1880
    %2000 = vmatprep.subr.bf16.mxu0 %v1885
    %2001 = vmatpush1.bf16.msra.mxu0 %v1884
    %2002 = vmatprep.subr.bf16.mxu0 %v1889
    %2003 = vmatpush1.bf16.msra.mxu0 %v1888
    %2004 = vmatprep.subr.bf16.mxu0 %v1893
    %2005 = vmatpush1.bf16.msra.mxu0 %v1892
    %2006 = vmatprep.subr.bf16.mxu0 %v1897
    %2007 = vmatpush1.bf16.msra.mxu0 %v1896
    %2008 = vmatprep.subr.bf16.mxu0 %v1901
    %2009 = vmatpush1.bf16.msra.mxu0 %v1900
    %2010 = vmatprep.subr.bf16.mxu0 %v1905
    %2011 = vmatpush1.bf16.msra.mxu0 %v1904
    %2012 = vmatprep.subr.bf16.mxu0 %v1909
    %2013 = vmatpush1.bf16.msra.mxu0 %v1908
    %2014 = vmatprep.subr.bf16.mxu0 %v1913
    %2015 = vmatpush1.bf16.msra.mxu0 %v1912
    %2016 = vmatprep.subr.bf16.mxu0 %v1917
    %2017 = vmatpush1.bf16.msra.mxu0 %v1916
    %2018 = vmatprep.subr.bf16.mxu0 %v1921
    %2019 = vmatpush1.bf16.msra.mxu0 %v1920
    %2020 = vmatprep.mubr.bf16.mxu0 %v1581
    %2021 = vmatmul.mubr.bf16.gmra.mrb[0].mxu0 %v1580
    %v2022 = vpop.f32.mrb[0].mxu0
    %v2023 = vadd.f32 %v1651, %v2022
    %v2024 = vpop.f32.mrb[0].mxu0
    %v2025 = vadd.f32 %v1655, %v2024
    %v2026 = vpop.f32.mrb[0].mxu0
    %v2027 = vpop.f32.mrb[0].mxu0
    %2028 = vdwg.mxu0
    %2029 = vmatprep.subr.bf16.mxu0 %v1863
    %2030 = vmatpush1.bf16.msra.mxu0 %v1862
    %2031 = vmatprep.subr.bf16.mxu0 %v1867
    %2032 = vmatpush1.bf16.msra.mxu0 %v1866
    %2033 = vmatprep.subr.bf16.mxu0 %v1871
    %2034 = vmatpush1.bf16.msra.mxu0 %v1870
    %2035 = vmatprep.subr.bf16.mxu0 %v1875
    %2036 = vmatpush1.bf16.msra.mxu0 %v1874
    %2037 = vmatprep.subr.bf16.mxu0 %v1879
    %2038 = vmatpush1.bf16.msra.mxu0 %v1878
    %2039 = vmatprep.subr.bf16.mxu0 %v1883
    %2040 = vmatpush1.bf16.msra.mxu0 %v1882
    %2041 = vmatprep.subr.bf16.mxu0 %v1887
    %2042 = vmatpush1.bf16.msra.mxu0 %v1886
    %2043 = vmatprep.subr.bf16.mxu0 %v1891
    %2044 = vmatpush1.bf16.msra.mxu0 %v1890
    %2045 = vmatprep.subr.bf16.mxu0 %v1895
    %2046 = vmatpush1.bf16.msra.mxu0 %v1894
    %2047 = vmatprep.subr.bf16.mxu0 %v1899
    %2048 = vmatpush1.bf16.msra.mxu0 %v1898
    %2049 = vmatprep.subr.bf16.mxu0 %v1903
    %2050 = vmatpush1.bf16.msra.mxu0 %v1902
    %2051 = vmatprep.subr.bf16.mxu0 %v1907
    %2052 = vmatpush1.bf16.msra.mxu0 %v1906
    %2053 = vmatprep.subr.bf16.mxu0 %v1911
    %2054 = vmatpush1.bf16.msra.mxu0 %v1910
    %2055 = vmatprep.subr.bf16.mxu0 %v1915
    %2056 = vmatpush1.bf16.msra.mxu0 %v1914
    %2057 = vmatprep.subr.bf16.mxu0 %v1919
    %2058 = vmatpush1.bf16.msra.mxu0 %v1918
    %2059 = vmatprep.subr.bf16.mxu0 %v1923
    %2060 = vmatpush1.bf16.msra.mxu0 %v1922
    %2061 = vmatprep.mubr.bf16.mxu0 %v1581
    %2062 = vmatmul.mubr.bf16.gmra.mrb[0].mxu0 %v1580
    %v2063 = vpop.f32.mrb[0].mxu0
    %v2064 = vadd.f32 %v1659, %v2063
    %v2065 = vpop.f32.mrb[0].mxu0
    %v2066 = vadd.f32 %v1663, %v2065
    %v2067 = vpop.f32.mrb[0].mxu0
    %v2068 = vpop.f32.mrb[0].mxu0
    %2069 = vdwg.mxu0
    %v2070 = vsel %vm622, %v2023, -inf
    %v2071 = vsel %vm622, %v2025, -inf
    %v2072 = vsel %vm622, %v2064, -inf
    %v2073 = vsel %vm622, %v2066, -inf
    %v2074 = vmax.f32 %v2070, %v2071
    %v2075 = vmax.f32 %v2072, %v2073
    %v2076 = vmax.f32 %v2074, %v2075
    %2077 = vmax.xlane.f32.xlu0 %v2076
    %v2078 = vpop.xlane.xlu0 %2077
    %v2079 = vsub.f32 %v2023, %v2078
    %v2080 = vsub.f32 %v2025, %v2078
    %v2081 = vsub.f32 %v2064, %v2078
    %v2082 = vsub.f32 %v2066, %v2078
    %v2083 = vmul.f32 %v2079, 1.442695
    %v2084 = vpow.pop %v2083
    %v2085 = vmul.f32 %v2080, 1.442695
    %v2086 = vpow.pop %v2085
    %v2087 = vmul.f32 %v2081, 1.442695
    %v2088 = vpow.pop %v2087
    %v2089 = vmul.f32 %v2082, 1.442695
    %v2090 = vpow.pop %v2089
    %v2091 = vsel %vm622, %v2084, 0.0
    %v2092 = vsel %vm622, %v2086, 0.0
    %v2093 = vadd.f32 %v2091, %v2092
    %v2094 = vsel %vm622, %v2088, 0.0
    %v2095 = vadd.f32 %v2093, %v2094
    %v2096 = vsel %vm622, %v2090, 0.0
    %v2097 = vadd.f32 %v2095, %v2096
    %2098 = vadd.xlane.f32.xlu0 %v2097
    %v2099 = vpop.xlane.xlu0 %2098
    %v2100 = vrcp.pop %v2099
    %v2101 = vmul.f32 %v2084, %v2100
    %v2102 = vmul.f32 %v2086, %v2100
    %v2103 = vmul.f32 %v2088, %v2100
    %v2104 = vmul.f32 %v2090, %v2100
    %v2109 = vcombine.low %v2101, %v2102
    %v2110 = vcombine.low %v2103, %v2104
    %v2112 = vunpack.c.l.s4 1983009808
    %v2113 = vunpack.c.0.s8 %v2112
    %v2114 = vlaneseq
    %v2115 = vshrl.u32 %v2114, 7
    %v2116 = vsub.s32 %v2113, %v2115
    %v2117 = vrot.slane %v2109, %v2116
    %v2119 = vunpack.c.l.s4 1983009808
    %v2120 = vunpack.c.0.s8 %v2119
    %v2121 = vlaneseq
    %v2122 = vshrl.u32 %v2121, 7
    %v2123 = vsub.s32 %v2120, %v2122
    %v2124 = vrot.slane %v2110, %v2123
    %v2125 = vcombine.low %v2117, %v2124
    %2127 = vst [vmem:[#allocation6] sm:$0xff] %v2125
    // Predicated region
    $region62: #{tpu_custom_call.1} parent=1 // pred_check
      _
    $region63: #{tpu_custom_call.1} parent=1 // pred_check_branch
      %2129 = sbr.rel (0) target = $region65
    $region64: #{tpu_custom_call.1} parent=1 // pred_region
      %s2131 = ssub.s32 128, 128
      %2132 = vsyncadd [#allocation5], %s2131
      %s2134 = sshll.u32 [#allocation6], 4
      %s2135 = int_to_ptr.vmem [resolvable:$true] %s2134
      %2137 = dma.vmem_to_hbm [thread:$0]  %s2135, 128, %s14, [#allocation5]
    $region65: #{tpu_custom_call.1} parent=1 // pred_fallthru
      _
    // Predicated region
    $region66: #{tpu_custom_call.1} parent=1 // pred_check
      _
    $region67: #{tpu_custom_call.1} parent=1 // pred_check_branch
      %2139 = sbr.rel (0) target = $region69
    $region68: #{tpu_custom_call.1} parent=1 // pred_region
      %2140 = dma.done [#allocation5], 128
    $region69: #{tpu_custom_call.1} parent=1 // pred_fallthru
      _
    %2141 = vsyncpa [#allocation4], 1
    %2142 = vsyncpa [#allocation5], 1

</llo_original>
